<compile_context>
chip_gen: v5e
topology: v5e:2x2
jax: 0.10.0
libtpu: 0.0.40
codegen_flags: <defaults>
</compile_context>

<pallas_src>
import jax
import jax.numpy as jnp
from jax.experimental import pallas as pl
from jax.experimental.pallas import tpu as pltpu


def _lstm2_kernel(gx1_ref,   # (T, Bt, 4H) precomputed layer-1 input gates (+ both layer-1 biases), f32
                  s0_ref,    # (4, Bt, H)  initial states [h1, c1, h2, c2], f32
                  wh1_ref,   # (H, 4H)     layer-1 hidden-path weight, bf16
                  wx2_ref,   # (H, 4H)     layer-2 input-path weight, bf16
                  wh2_ref,   # (H, 4H)     layer-2 hidden-path weight, bf16
                  b2_ref,    # (1, 4H)     layer-2 fused bias (bx2 + bh2), f32
                  y_ref,     # (Bt, T, H)  per-step layer-2 hidden output (batch-major)
                  sf_ref):   # (4, Bt, H)  final states; doubles as the resident recurrent carry
    t = pl.program_id(1)                  # time-chunk index (serial axis)
    T = gx1_ref.shape[0]
    Bt = s0_ref.shape[1]
    H = s0_ref.shape[-1]

    # First chunk of every batch block: load the initial states into the
    # resident output block (which carries the recurrence between chunks).
    @pl.when(t == 0)
    def _():
        sf_ref[...] = s0_ref[...]

    wh1 = wh1_ref[...]
    wx2 = wx2_ref[...]
    wh2 = wh2_ref[...]
    # Hoisted once per chunk, not per unrolled step.
    b2 = jnp.broadcast_to(b2_ref[...], (Bt, 4 * H))

    def activate(gates, c_prev):
        # Packed gate order [i, f, o, g]: one contiguous sigmoid slice + one tanh slice.
        s = jax.nn.sigmoid(gates[:, 0:3 * H])
        i_g = s[:, 0:H]
        f_g = s[:, H:2 * H]
        o_g = s[:, 2 * H:3 * H]
        g_g = jnp.tanh(gates[:, 3 * H:4 * H])
        c_next = g_g * i_g + f_g * c_prev
        h_next = o_g * jnp.tanh(c_next)
        return h_next, c_next

    h1 = sf_ref[0]
    c1 = sf_ref[1]
    h2 = sf_ref[2]
    c2 = sf_ref[3]

    # Static, fully-unrolled time loop: every store below uses static slices.
    for tt in range(T):
        # Layer 1: x-projection (and both biases) precomputed in the wrapper;
        # only the hidden-path matmul sits on the serial path.  bf16 MXU.
        g1 = gx1_ref[tt] + jnp.dot(h1.astype(jnp.bfloat16), wh1,
                                   preferred_element_type=jnp.float32)
        h1, c1 = activate(g1, c1)

        # Layer 2: two bf16 matmuls (no per-step concatenate) + hoisted bias.
        g2 = (jnp.dot(h1.astype(jnp.bfloat16), wx2,
                      preferred_element_type=jnp.float32)
              + jnp.dot(h2.astype(jnp.bfloat16), wh2,
                        preferred_element_type=jnp.float32)
              + b2)
        h2, c2 = activate(g2, c2)

        # Batch-major output written in-kernel (no wrapper transpose).
        y_ref[:, tt:tt + 1, :] = h2[:, None, :]

    # Carry state to the next chunk / expose final states.
    sf_ref[0] = h1
    sf_ref[1] = c1
    sf_ref[2] = h2
    sf_ref[3] = c2


def _pick_chunk(seq_len, max_chunk=32):
    """Largest divisor of seq_len <= max_chunk, preferring values that keep the
    (B, T, H) output block sublane-aligned (T % 8 == 0 or T == seq_len)."""
    fallback = 1
    for c in range(min(seq_len, max_chunk), 0, -1):
        if seq_len % c:
            continue
        if c == seq_len or c % 8 == 0:
            return c
        if fallback == 1:
            fallback = c
    return fallback


def lstms_orth_forward(x, hidden_in, params, *, max_chunk=32, batch_block=None):
    """x: (B, S, D) float32; hidden_in: ((h1, c1), (h2, c2)) each (B, H).
    Returns (lstm_out (B, S, H), [(h1, c1), (h2, c2)]).

    batch_block: size of the batch tile handled per grid step along the leading
    'parallel' grid axis (set to a multiple of 8 that divides B to shard
    independent sequences across v7x's two TensorCores). Defaults to B."""
    (h1_0, c1_0), (h2_0, c2_0) = hidden_in
    wx1, bx1, wh1, bh1, wx2, bx2, wh2, bh2 = params

    B, S, D = x.shape
    H = h1_0.shape[-1]

    T = _pick_chunk(S, max_chunk)
    n_chunks = S // T

    if batch_block is None:
        batch_block = B
    assert B % batch_block == 0
    n_bblk = B // batch_block

    # Hoist the layer-1 input projection out of the recurrence: one large GEMM
    # over the whole sequence, produced directly in time-major (S, B, 4H)
    # layout, with both layer-1 biases folded in.
    gx1 = jnp.einsum('bsd,dg->sbg', x, wx1) + (bx1 + bh1)        # (S, B, 4H) f32

    # Recurrent-path weights in bf16 (MXU-native on v5e/v6e/v7x); biases f32.
    wh1_b = wh1.astype(jnp.bfloat16)                             # (H, 4H)
    wx2_b = wx2.astype(jnp.bfloat16)                             # (H, 4H)
    wh2_b = wh2.astype(jnp.bfloat16)                             # (H, 4H)
    b2 = (bx2 + bh2).astype(jnp.float32)                         # (1, 4H)

    s0 = jnp.stack([h1_0, c1_0, h2_0, c2_0], axis=0)             # (4, B, H)

    grid_spec = pltpu.PrefetchScalarGridSpec(
        num_scalar_prefetch=0,
        grid=(n_bblk, n_chunks),                                 # (parallel, serial)
        in_specs=[
            pl.BlockSpec((T, batch_block, 4 * H), lambda b, t: (t, b, 0)),  # gate chunk
            pl.BlockSpec((4, batch_block, H), lambda b, t: (0, b, 0)),      # initial states
            pl.BlockSpec((H, 4 * H), lambda b, t: (0, 0)),                  # Wh1
            pl.BlockSpec((H, 4 * H), lambda b, t: (0, 0)),                  # Wx2
            pl.BlockSpec((H, 4 * H), lambda b, t: (0, 0)),                  # Wh2
            pl.BlockSpec((1, 4 * H), lambda b, t: (0, 0)),                  # fused bias2
        ],
        out_specs=[
            pl.BlockSpec((batch_block, T, H), lambda b, t: (b, t, 0)),      # y, batch-major
            pl.BlockSpec((4, batch_block, H), lambda b, t: (0, b, 0)),      # final states
        ],
    )

    lstm_out, s_f = pl.pallas_call(
        _lstm2_kernel,
        out_shape=(jax.ShapeDtypeStruct((B, S, H), jnp.float32),
                   jax.ShapeDtypeStruct((4, B, H), jnp.float32)),
        grid_spec=grid_spec,
        compiler_params=pltpu.CompilerParams(
            dimension_semantics=("parallel", "arbitrary"),       # batch ||, time serial
            vmem_limit_bytes=32 * 1024 * 1024),                  # safe on v5e/v6e/v7x
    )(gx1, s0, wh1_b, wx2_b, wh2_b, b2)

    return lstm_out, [(s_f[0], s_f[1]), (s_f[2], s_f[3])]


def _init_linear(key, fan_in, fan_out):
    """torch.nn.Linear default init: U(-1/sqrt(fan_in), 1/sqrt(fan_in))."""
    kw, kb = jax.random.split(key)
    bound = 1.0 / jnp.sqrt(fan_in)
    w = jax.random.uniform(kw, (fan_in, fan_out), jnp.float32, -bound, bound)
    b = jax.random.uniform(kb, (fan_out,), jnp.float32, -bound, bound)
    return w, b


def _init_layer(key, input_size, hidden_size):
    """Pack the 8 Linear layers of one LSTM_Orth into (Wx, bx, Wh, bh),
    gate order [i, f, o, g] (sigmoid gates contiguous, tanh gate last)."""
    keys = jax.random.split(key, 8)
    wii, bii = _init_linear(keys[0], input_size, hidden_size)
    wif, bif = _init_linear(keys[1], input_size, hidden_size)
    wig, big = _init_linear(keys[2], input_size, hidden_size)
    wio, bio = _init_linear(keys[3], input_size, hidden_size)
    whi, bhi = _init_linear(keys[4], hidden_size, hidden_size)
    whf, bhf = _init_linear(keys[5], hidden_size, hidden_size)
    whg, bhg = _init_linear(keys[6], hidden_size, hidden_size)
    who, bho = _init_linear(keys[7], hidden_size, hidden_size)
    wx = jnp.concatenate([wii, wif, wio, wig], axis=1)
    bx = jnp.concatenate([bii, bif, bio, big])[None, :]
    wh = jnp.concatenate([whi, whf, who, whg], axis=1)
    bh = jnp.concatenate([bhi, bhf, bho, bhg])[None, :]
    return wx, bx, wh, bh


def _reference_forward(x, hidden_in, params):
    """Pure-JAX f32 reference matching the PyTorch loop (gate order [i, f, o, g])."""
    (h1, c1), (h2, c2) = hidden_in
    wx1, bx1, wh1, bh1, wx2, bx2, wh2, bh2 = params
    H = h1.shape[-1]

    def cell(xt, h, c, wx, bx, wh, bh):
        gates = xt @ wx + bx + h @ wh + bh
        i = jax.nn.sigmoid(gates[:, 0:H])
        f = jax.nn.sigmoid(gates[:, H:2 * H])
        o = jax.nn.sigmoid(gates[:, 2 * H:3 * H])
        g = jnp.tanh(gates[:, 3 * H:4 * H])
        c_next = g * i + f * c
        return o * jnp.tanh(c_next), c_next

    outs = []
    for t in range(x.shape[1]):
        h1, c1 = cell(x[:, t, :], h1, c1, wx1, bx1, wh1, bh1)
        h2, c2 = cell(h1, h2, c2, wx2, bx2, wh2, bh2)
        outs.append(h2)
    return jnp.stack(outs, axis=1), [(h1, c1), (h2, c2)]


if __name__ == "__main__":
    B, S, D, H = 2, 8, 4, 32

    key = jax.random.PRNGKey(0)
    k_x, k_h1, k_c1, k_h2, k_c2, k_l1, k_l2 = jax.random.split(key, 7)

    x = jax.random.normal(k_x, (B, S, D), jnp.float32)
    h1_0 = jax.random.normal(k_h1, (B, H), jnp.float32)
    c1_0 = jax.random.normal(k_c1, (B, H), jnp.float32)
    h2_0 = jax.random.normal(k_h2, (B, H), jnp.float32)
    c2_0 = jax.random.normal(k_c2, (B, H), jnp.float32)

    params = _init_layer(k_l1, D, H) + _init_layer(k_l2, H, H)
    hidden_in = ((h1_0, c1_0), (h2_0, c2_0))

    lstm_out, hidden_out = lstms_orth_forward(x, hidden_in, params)
    jax.block_until_ready(lstm_out)
    jax.block_until_ready(hidden_out)

    # Sanity check against a pure-JAX f32 reference of the same math.
    # Tolerance is loosened because the kernel runs its recurrent-path
    # matmuls in bf16 on the MXU (f32 accumulation).
    ref_out, ref_hidden = _reference_forward(x, hidden_in, params)
    assert jnp.allclose(lstm_out, ref_out, atol=2e-2, rtol=2e-2)
    for (ha, ca), (hb, cb) in zip(hidden_out, ref_hidden):
        assert jnp.allclose(ha, hb, atol=2e-2, rtol=2e-2)
        assert jnp.allclose(ca, cb, atol=2e-2, rtol=2e-2)

    print("KERNEL_OK")
</pallas_src>

<mosaic_0001>
module attributes {stable_mosaic.version = 11 : i64} {
  func.func @_lstm2_kernel(%arg0: i32, %arg1: i32, %arg2: memref<8x2x128xf32, #tpu.memory_space<vmem>>, %arg3: memref<4x2x32xf32, #tpu.memory_space<vmem>>, %arg4: memref<32x128xbf16, #tpu.memory_space<vmem>>, %arg5: memref<32x128xbf16, #tpu.memory_space<vmem>>, %arg6: memref<32x128xbf16, #tpu.memory_space<vmem>>, %arg7: memref<1x128xf32, #tpu.memory_space<vmem>>, %arg8: memref<2x8x32xf32, #tpu.memory_space<vmem>>, %arg9: memref<4x2x32xf32, #tpu.memory_space<vmem>>) attributes {dimension_semantics = [#tpu.dimension_semantics<parallel>, #tpu.dimension_semantics<arbitrary>], iteration_bounds = array<i64: 1, 1>, scalar_prefetch = 0 : i64, scratch_operands = 0 : i64, tpu.core_type = #tpu.core_type<tc>, window_params = [{transform_indices = @transform_0, window_bounds = array<i64: 8, 2, 128>}, {transform_indices = @transform_1, window_bounds = array<i64: 4, 2, 32>}, {pipeline_mode = #tpu.pipeline_mode<synchronous>, transform_indices = @transform_2, window_bounds = array<i64: 32, 128>}, {pipeline_mode = #tpu.pipeline_mode<synchronous>, transform_indices = @transform_3, window_bounds = array<i64: 32, 128>}, {pipeline_mode = #tpu.pipeline_mode<synchronous>, transform_indices = @transform_4, window_bounds = array<i64: 32, 128>}, {pipeline_mode = #tpu.pipeline_mode<synchronous>, transform_indices = @transform_5, window_bounds = array<i64: 1, 128>}, {transform_indices = @transform_6, window_bounds = array<i64: 2, 8, 32>}, {transform_indices = @transform_7, window_bounds = array<i64: 4, 2, 32>}]} {
    %c0_i32 = arith.constant 0 : i32
    %0 = arith.cmpi eq, %arg1, %c0_i32 : i32
    %1 = arith.extui %0 : i1 to i32
    %c0_i32_0 = arith.constant 0 : i32
    %2 = arith.cmpi ne, %1, %c0_i32_0 : i32
    scf.if %2 {
      %c0_112 = arith.constant 0 : index
      %c0_113 = arith.constant 0 : index
      %c0_114 = arith.constant 0 : index
      %389 = vector.load %arg3[%c0_112, %c0_113, %c0_114] : memref<4x2x32xf32, #tpu.memory_space<vmem>>, vector<4x2x32xf32>
      %c0_115 = arith.constant 0 : index
      %c0_116 = arith.constant 0 : index
      %c0_117 = arith.constant 0 : index
      %390 = vector.load %arg9[%c0_115, %c0_116, %c0_117] : memref<4x2x32xf32, #tpu.memory_space<vmem>>, vector<4x2x32xf32>
      tpu.vector_store %arg9[%c0_115, %c0_116, %c0_117], %389 {strides = array<i32>} : memref<4x2x32xf32, #tpu.memory_space<vmem>>, vector<4x2x32xf32>,
    } else {
    }
    %c0 = arith.constant 0 : index
    %c0_1 = arith.constant 0 : index
    %3 = vector.load %arg4[%c0, %c0_1] : memref<32x128xbf16, #tpu.memory_space<vmem>>, vector<32x128xbf16>
    %c0_2 = arith.constant 0 : index
    %c0_3 = arith.constant 0 : index
    %4 = vector.load %arg5[%c0_2, %c0_3] : memref<32x128xbf16, #tpu.memory_space<vmem>>, vector<32x128xbf16>
    %c0_4 = arith.constant 0 : index
    %c0_5 = arith.constant 0 : index
    %5 = vector.load %arg6[%c0_4, %c0_5] : memref<32x128xbf16, #tpu.memory_space<vmem>>, vector<32x128xbf16>
    %c0_6 = arith.constant 0 : index
    %c0_7 = arith.constant 0 : index
    %6 = vector.load %arg7[%c0_6, %c0_7] : memref<1x128xf32, #tpu.memory_space<vmem>>, vector<1x128xf32>
    %7 = vector.shape_cast %6 : vector<1x128xf32> to vector<1x128xf32>
    %8 = vector.broadcast %7 : vector<1x128xf32> to vector<2x128xf32>
    %c0_8 = arith.constant 0 : index
    %c0_9 = arith.constant 0 : index
    %c0_10 = arith.constant 0 : index
    %9 = vector.load %arg9[%c0_8, %c0_9, %c0_10] : memref<4x2x32xf32, #tpu.memory_space<vmem>>, vector<1x2x32xf32>
    %10 = vector.shape_cast %9 : vector<1x2x32xf32> to vector<2x32xf32>
    %c1 = arith.constant 1 : index
    %c0_11 = arith.constant 0 : index
    %c0_12 = arith.constant 0 : index
    %11 = vector.load %arg9[%c1, %c0_11, %c0_12] : memref<4x2x32xf32, #tpu.memory_space<vmem>>, vector<1x2x32xf32>
    %12 = vector.shape_cast %11 : vector<1x2x32xf32> to vector<2x32xf32>
    %c2 = arith.constant 2 : index
    %c0_13 = arith.constant 0 : index
    %c0_14 = arith.constant 0 : index
    %13 = vector.load %arg9[%c2, %c0_13, %c0_14] : memref<4x2x32xf32, #tpu.memory_space<vmem>>, vector<1x2x32xf32>
    %14 = vector.shape_cast %13 : vector<1x2x32xf32> to vector<2x32xf32>
    %c3 = arith.constant 3 : index
    %c0_15 = arith.constant 0 : index
    %c0_16 = arith.constant 0 : index
    %15 = vector.load %arg9[%c3, %c0_15, %c0_16] : memref<4x2x32xf32, #tpu.memory_space<vmem>>, vector<1x2x32xf32>
    %16 = vector.shape_cast %15 : vector<1x2x32xf32> to vector<2x32xf32>
    %c0_17 = arith.constant 0 : index
    %c0_18 = arith.constant 0 : index
    %c0_19 = arith.constant 0 : index
    %17 = vector.load %arg2[%c0_17, %c0_18, %c0_19] : memref<8x2x128xf32, #tpu.memory_space<vmem>>, vector<1x2x128xf32>
    %18 = vector.shape_cast %17 : vector<1x2x128xf32> to vector<2x128xf32>
    %19 = arith.truncf %10 : vector<2x32xf32> to vector<2x32xbf16>
    %cst = arith.constant dense<0.000000e+00> : vector<2x128xf32>
    %20 = tpu.matmul %19, %3, %cst {dimension_numbers = #tpu.dot_dimension_numbers<[1], [0], [0], [1], [0, 0, 1, 1], [], []>} : vector<2x32xbf16>, vector<32x128xbf16>, vector<2x128xf32> -> vector<2x128xf32>
    %21 = arith.addf %18, %20 : vector<2x128xf32>
    %22 = vector.extract_strided_slice %21 {offsets = [0, 0], sizes = [2, 96], strides = [1, 1]} : vector<2x128xf32> to vector<2x96xf32>
    %23 = arith.negf %22 : vector<2x96xf32>
    %24 = math.exp %23 : vector<2x96xf32>
    %cst_20 = arith.constant 1.000000e+00 : f32
    %25 = vector.broadcast %cst_20 : f32 to vector<2x96xf32>
    %26 = arith.addf %25, %24 : vector<2x96xf32>
    %27 = arith.divf %25, %26 : vector<2x96xf32>
    %28 = vector.extract_strided_slice %27 {offsets = [0, 0], sizes = [2, 32], strides = [1, 1]} : vector<2x96xf32> to vector<2x32xf32>
    %29 = vector.extract_strided_slice %27 {offsets = [0, 32], sizes = [2, 32], strides = [1, 1]} : vector<2x96xf32> to vector<2x32xf32>
    %30 = vector.extract_strided_slice %27 {offsets = [0, 64], sizes = [2, 32], strides = [1, 1]} : vector<2x96xf32> to vector<2x32xf32>
    %31 = vector.extract_strided_slice %21 {offsets = [0, 96], sizes = [2, 32], strides = [1, 1]} : vector<2x128xf32> to vector<2x32xf32>
    %32 = math.tanh %31 : vector<2x32xf32>
    %33 = arith.mulf %32, %28 : vector<2x32xf32>
    %34 = arith.mulf %29, %12 : vector<2x32xf32>
    %35 = arith.addf %33, %34 : vector<2x32xf32>
    %36 = math.tanh %35 : vector<2x32xf32>
    %37 = arith.mulf %30, %36 : vector<2x32xf32>
    %38 = arith.truncf %37 : vector<2x32xf32> to vector<2x32xbf16>
    %cst_21 = arith.constant dense<0.000000e+00> : vector<2x128xf32>
    %39 = tpu.matmul %38, %4, %cst_21 {dimension_numbers = #tpu.dot_dimension_numbers<[1], [0], [0], [1], [0, 0, 1, 1], [], []>} : vector<2x32xbf16>, vector<32x128xbf16>, vector<2x128xf32> -> vector<2x128xf32>
    %40 = arith.truncf %14 : vector<2x32xf32> to vector<2x32xbf16>
    %cst_22 = arith.constant dense<0.000000e+00> : vector<2x128xf32>
    %41 = tpu.matmul %40, %5, %cst_22 {dimension_numbers = #tpu.dot_dimension_numbers<[1], [0], [0], [1], [0, 0, 1, 1], [], []>} : vector<2x32xbf16>, vector<32x128xbf16>, vector<2x128xf32> -> vector<2x128xf32>
    %42 = arith.addf %39, %41 : vector<2x128xf32>
    %43 = arith.addf %42, %8 : vector<2x128xf32>
    %44 = vector.extract_strided_slice %43 {offsets = [0, 0], sizes = [2, 96], strides = [1, 1]} : vector<2x128xf32> to vector<2x96xf32>
    %45 = arith.negf %44 : vector<2x96xf32>
    %46 = math.exp %45 : vector<2x96xf32>
    %cst_23 = arith.constant 1.000000e+00 : f32
    %47 = vector.broadcast %cst_23 : f32 to vector<2x96xf32>
    %48 = arith.addf %47, %46 : vector<2x96xf32>
    %49 = arith.divf %47, %48 : vector<2x96xf32>
    %50 = vector.extract_strided_slice %49 {offsets = [0, 0], sizes = [2, 32], strides = [1, 1]} : vector<2x96xf32> to vector<2x32xf32>
    %51 = vector.extract_strided_slice %49 {offsets = [0, 32], sizes = [2, 32], strides = [1, 1]} : vector<2x96xf32> to vector<2x32xf32>
    %52 = vector.extract_strided_slice %49 {offsets = [0, 64], sizes = [2, 32], strides = [1, 1]} : vector<2x96xf32> to vector<2x32xf32>
    %53 = vector.extract_strided_slice %43 {offsets = [0, 96], sizes = [2, 32], strides = [1, 1]} : vector<2x128xf32> to vector<2x32xf32>
    %54 = math.tanh %53 : vector<2x32xf32>
    %55 = arith.mulf %54, %50 : vector<2x32xf32>
    %56 = arith.mulf %51, %16 : vector<2x32xf32>
    %57 = arith.addf %55, %56 : vector<2x32xf32>
    %58 = math.tanh %57 : vector<2x32xf32>
    %59 = arith.mulf %52, %58 : vector<2x32xf32>
    %60 = vector.shape_cast %59 : vector<2x32xf32> to vector<2x1x32xf32>
    %c0_24 = arith.constant 0 : index
    %c0_25 = arith.constant 0 : index
    %c0_26 = arith.constant 0 : index
    %61 = vector.load %arg8[%c0_24, %c0_25, %c0_26] : memref<2x8x32xf32, #tpu.memory_space<vmem>>, vector<2x1x32xf32>
    tpu.vector_store %arg8[%c0_24, %c0_25, %c0_26], %60 {strides = array<i32>} : memref<2x8x32xf32, #tpu.memory_space<vmem>>, vector<2x1x32xf32>,
    %c1_27 = arith.constant 1 : index
    %c0_28 = arith.constant 0 : index
    %c0_29 = arith.constant 0 : index
    %62 = vector.load %arg2[%c1_27, %c0_28, %c0_29] : memref<8x2x128xf32, #tpu.memory_space<vmem>>, vector<1x2x128xf32>
    %63 = vector.shape_cast %62 : vector<1x2x128xf32> to vector<2x128xf32>
    %64 = arith.truncf %37 : vector<2x32xf32> to vector<2x32xbf16>
    %cst_30 = arith.constant dense<0.000000e+00> : vector<2x128xf32>
    %65 = tpu.matmul %64, %3, %cst_30 {dimension_numbers = #tpu.dot_dimension_numbers<[1], [0], [0], [1], [0, 0, 1, 1], [], []>} : vector<2x32xbf16>, vector<32x128xbf16>, vector<2x128xf32> -> vector<2x128xf32>
    %66 = arith.addf %63, %65 : vector<2x128xf32>
    %67 = vector.extract_strided_slice %66 {offsets = [0, 0], sizes = [2, 96], strides = [1, 1]} : vector<2x128xf32> to vector<2x96xf32>
    %68 = arith.negf %67 : vector<2x96xf32>
    %69 = math.exp %68 : vector<2x96xf32>
    %cst_31 = arith.constant 1.000000e+00 : f32
    %70 = vector.broadcast %cst_31 : f32 to vector<2x96xf32>
    %71 = arith.addf %70, %69 : vector<2x96xf32>
    %72 = arith.divf %70, %71 : vector<2x96xf32>
    %73 = vector.extract_strided_slice %72 {offsets = [0, 0], sizes = [2, 32], strides = [1, 1]} : vector<2x96xf32> to vector<2x32xf32>
    %74 = vector.extract_strided_slice %72 {offsets = [0, 32], sizes = [2, 32], strides = [1, 1]} : vector<2x96xf32> to vector<2x32xf32>
    %75 = vector.extract_strided_slice %72 {offsets = [0, 64], sizes = [2, 32], strides = [1, 1]} : vector<2x96xf32> to vector<2x32xf32>
    %76 = vector.extract_strided_slice %66 {offsets = [0, 96], sizes = [2, 32], strides = [1, 1]} : vector<2x128xf32> to vector<2x32xf32>
    %77 = math.tanh %76 : vector<2x32xf32>
    %78 = arith.mulf %77, %73 : vector<2x32xf32>
    %79 = arith.mulf %74, %35 : vector<2x32xf32>
    %80 = arith.addf %78, %79 : vector<2x32xf32>
    %81 = math.tanh %80 : vector<2x32xf32>
    %82 = arith.mulf %75, %81 : vector<2x32xf32>
    %83 = arith.truncf %82 : vector<2x32xf32> to vector<2x32xbf16>
    %cst_32 = arith.constant dense<0.000000e+00> : vector<2x128xf32>
    %84 = tpu.matmul %83, %4, %cst_32 {dimension_numbers = #tpu.dot_dimension_numbers<[1], [0], [0], [1], [0, 0, 1, 1], [], []>} : vector<2x32xbf16>, vector<32x128xbf16>, vector<2x128xf32> -> vector<2x128xf32>
    %85 = arith.truncf %59 : vector<2x32xf32> to vector<2x32xbf16>
    %cst_33 = arith.constant dense<0.000000e+00> : vector<2x128xf32>
    %86 = tpu.matmul %85, %5, %cst_33 {dimension_numbers = #tpu.dot_dimension_numbers<[1], [0], [0], [1], [0, 0, 1, 1], [], []>} : vector<2x32xbf16>, vector<32x128xbf16>, vector<2x128xf32> -> vector<2x128xf32>
    %87 = arith.addf %84, %86 : vector<2x128xf32>
    %88 = arith.addf %87, %8 : vector<2x128xf32>
    %89 = vector.extract_strided_slice %88 {offsets = [0, 0], sizes = [2, 96], strides = [1, 1]} : vector<2x128xf32> to vector<2x96xf32>
    %90 = arith.negf %89 : vector<2x96xf32>
    %91 = math.exp %90 : vector<2x96xf32>
    %cst_34 = arith.constant 1.000000e+00 : f32
    %92 = vector.broadcast %cst_34 : f32 to vector<2x96xf32>
    %93 = arith.addf %92, %91 : vector<2x96xf32>
    %94 = arith.divf %92, %93 : vector<2x96xf32>
    %95 = vector.extract_strided_slice %94 {offsets = [0, 0], sizes = [2, 32], strides = [1, 1]} : vector<2x96xf32> to vector<2x32xf32>
    %96 = vector.extract_strided_slice %94 {offsets = [0, 32], sizes = [2, 32], strides = [1, 1]} : vector<2x96xf32> to vector<2x32xf32>
    %97 = vector.extract_strided_slice %94 {offsets = [0, 64], sizes = [2, 32], strides = [1, 1]} : vector<2x96xf32> to vector<2x32xf32>
    %98 = vector.extract_strided_slice %88 {offsets = [0, 96], sizes = [2, 32], strides = [1, 1]} : vector<2x128xf32> to vector<2x32xf32>
    %99 = math.tanh %98 : vector<2x32xf32>
    %100 = arith.mulf %99, %95 : vector<2x32xf32>
    %101 = arith.mulf %96, %57 : vector<2x32xf32>
    %102 = arith.addf %100, %101 : vector<2x32xf32>
    %103 = math.tanh %102 : vector<2x32xf32>
    %104 = arith.mulf %97, %103 : vector<2x32xf32>
    %105 = vector.shape_cast %104 : vector<2x32xf32> to vector<2x1x32xf32>
    %c0_35 = arith.constant 0 : index
    %c1_36 = arith.constant 1 : index
    %c0_37 = arith.constant 0 : index
    %106 = vector.load %arg8[%c0_35, %c1_36, %c0_37] : memref<2x8x32xf32, #tpu.memory_space<vmem>>, vector<2x1x32xf32>
    tpu.vector_store %arg8[%c0_35, %c1_36, %c0_37], %105 {strides = array<i32>} : memref<2x8x32xf32, #tpu.memory_space<vmem>>, vector<2x1x32xf32>,
    %c2_38 = arith.constant 2 : index
    %c0_39 = arith.constant 0 : index
    %c0_40 = arith.constant 0 : index
    %107 = vector.load %arg2[%c2_38, %c0_39, %c0_40] : memref<8x2x128xf32, #tpu.memory_space<vmem>>, vector<1x2x128xf32>
    %108 = vector.shape_cast %107 : vector<1x2x128xf32> to vector<2x128xf32>
    %109 = arith.truncf %82 : vector<2x32xf32> to vector<2x32xbf16>
    %cst_41 = arith.constant dense<0.000000e+00> : vector<2x128xf32>
    %110 = tpu.matmul %109, %3, %cst_41 {dimension_numbers = #tpu.dot_dimension_numbers<[1], [0], [0], [1], [0, 0, 1, 1], [], []>} : vector<2x32xbf16>, vector<32x128xbf16>, vector<2x128xf32> -> vector<2x128xf32>
    %111 = arith.addf %108, %110 : vector<2x128xf32>
    %112 = vector.extract_strided_slice %111 {offsets = [0, 0], sizes = [2, 96], strides = [1, 1]} : vector<2x128xf32> to vector<2x96xf32>
    %113 = arith.negf %112 : vector<2x96xf32>
    %114 = math.exp %113 : vector<2x96xf32>
    %cst_42 = arith.constant 1.000000e+00 : f32
    %115 = vector.broadcast %cst_42 : f32 to vector<2x96xf32>
    %116 = arith.addf %115, %114 : vector<2x96xf32>
    %117 = arith.divf %115, %116 : vector<2x96xf32>
    %118 = vector.extract_strided_slice %117 {offsets = [0, 0], sizes = [2, 32], strides = [1, 1]} : vector<2x96xf32> to vector<2x32xf32>
    %119 = vector.extract_strided_slice %117 {offsets = [0, 32], sizes = [2, 32], strides = [1, 1]} : vector<2x96xf32> to vector<2x32xf32>
    %120 = vector.extract_strided_slice %117 {offsets = [0, 64], sizes = [2, 32], strides = [1, 1]} : vector<2x96xf32> to vector<2x32xf32>
    %121 = vector.extract_strided_slice %111 {offsets = [0, 96], sizes = [2, 32], strides = [1, 1]} : vector<2x128xf32> to vector<2x32xf32>
    %122 = math.tanh %121 : vector<2x32xf32>
    %123 = arith.mulf %122, %118 : vector<2x32xf32>
    %124 = arith.mulf %119, %80 : vector<2x32xf32>
    %125 = arith.addf %123, %124 : vector<2x32xf32>
    %126 = math.tanh %125 : vector<2x32xf32>
    %127 = arith.mulf %120, %126 : vector<2x32xf32>
    %128 = arith.truncf %127 : vector<2x32xf32> to vector<2x32xbf16>
    %cst_43 = arith.constant dense<0.000000e+00> : vector<2x128xf32>
    %129 = tpu.matmul %128, %4, %cst_43 {dimension_numbers = #tpu.dot_dimension_numbers<[1], [0], [0], [1], [0, 0, 1, 1], [], []>} : vector<2x32xbf16>, vector<32x128xbf16>, vector<2x128xf32> -> vector<2x128xf32>
    %130 = arith.truncf %104 : vector<2x32xf32> to vector<2x32xbf16>
    %cst_44 = arith.constant dense<0.000000e+00> : vector<2x128xf32>
    %131 = tpu.matmul %130, %5, %cst_44 {dimension_numbers = #tpu.dot_dimension_numbers<[1], [0], [0], [1], [0, 0, 1, 1], [], []>} : vector<2x32xbf16>, vector<32x128xbf16>, vector<2x128xf32> -> vector<2x128xf32>
    %132 = arith.addf %129, %131 : vector<2x128xf32>
    %133 = arith.addf %132, %8 : vector<2x128xf32>
    %134 = vector.extract_strided_slice %133 {offsets = [0, 0], sizes = [2, 96], strides = [1, 1]} : vector<2x128xf32> to vector<2x96xf32>
    %135 = arith.negf %134 : vector<2x96xf32>
    %136 = math.exp %135 : vector<2x96xf32>
    %cst_45 = arith.constant 1.000000e+00 : f32
    %137 = vector.broadcast %cst_45 : f32 to vector<2x96xf32>
    %138 = arith.addf %137, %136 : vector<2x96xf32>
    %139 = arith.divf %137, %138 : vector<2x96xf32>
    %140 = vector.extract_strided_slice %139 {offsets = [0, 0], sizes = [2, 32], strides = [1, 1]} : vector<2x96xf32> to vector<2x32xf32>
    %141 = vector.extract_strided_slice %139 {offsets = [0, 32], sizes = [2, 32], strides = [1, 1]} : vector<2x96xf32> to vector<2x32xf32>
    %142 = vector.extract_strided_slice %139 {offsets = [0, 64], sizes = [2, 32], strides = [1, 1]} : vector<2x96xf32> to vector<2x32xf32>
    %143 = vector.extract_strided_slice %133 {offsets = [0, 96], sizes = [2, 32], strides = [1, 1]} : vector<2x128xf32> to vector<2x32xf32>
    %144 = math.tanh %143 : vector<2x32xf32>
    %145 = arith.mulf %144, %140 : vector<2x32xf32>
    %146 = arith.mulf %141, %102 : vector<2x32xf32>
    %147 = arith.addf %145, %146 : vector<2x32xf32>
    %148 = math.tanh %147 : vector<2x32xf32>
    %149 = arith.mulf %142, %148 : vector<2x32xf32>
    %150 = vector.shape_cast %149 : vector<2x32xf32> to vector<2x1x32xf32>
    %c0_46 = arith.constant 0 : index
    %c2_47 = arith.constant 2 : index
    %c0_48 = arith.constant 0 : index
    %151 = vector.load %arg8[%c0_46, %c2_47, %c0_48] : memref<2x8x32xf32, #tpu.memory_space<vmem>>, vector<2x1x32xf32>
    tpu.vector_store %arg8[%c0_46, %c2_47, %c0_48], %150 {strides = array<i32>} : memref<2x8x32xf32, #tpu.memory_space<vmem>>, vector<2x1x32xf32>,
    %c3_49 = arith.constant 3 : index
    %c0_50 = arith.constant 0 : index
    %c0_51 = arith.constant 0 : index
    %152 = vector.load %arg2[%c3_49, %c0_50, %c0_51] : memref<8x2x128xf32, #tpu.memory_space<vmem>>, vector<1x2x128xf32>
    %153 = vector.shape_cast %152 : vector<1x2x128xf32> to vector<2x128xf32>
    %154 = arith.truncf %127 : vector<2x32xf32> to vector<2x32xbf16>
    %cst_52 = arith.constant dense<0.000000e+00> : vector<2x128xf32>
    %155 = tpu.matmul %154, %3, %cst_52 {dimension_numbers = #tpu.dot_dimension_numbers<[1], [0], [0], [1], [0, 0, 1, 1], [], []>} : vector<2x32xbf16>, vector<32x128xbf16>, vector<2x128xf32> -> vector<2x128xf32>
    %156 = arith.addf %153, %155 : vector<2x128xf32>
    %157 = vector.extract_strided_slice %156 {offsets = [0, 0], sizes = [2, 96], strides = [1, 1]} : vector<2x128xf32> to vector<2x96xf32>
    %158 = arith.negf %157 : vector<2x96xf32>
    %159 = math.exp %158 : vector<2x96xf32>
    %cst_53 = arith.constant 1.000000e+00 : f32
    %160 = vector.broadcast %cst_53 : f32 to vector<2x96xf32>
    %161 = arith.addf %160, %159 : vector<2x96xf32>
    %162 = arith.divf %160, %161 : vector<2x96xf32>
    %163 = vector.extract_strided_slice %162 {offsets = [0, 0], sizes = [2, 32], strides = [1, 1]} : vector<2x96xf32> to vector<2x32xf32>
    %164 = vector.extract_strided_slice %162 {offsets = [0, 32], sizes = [2, 32], strides = [1, 1]} : vector<2x96xf32> to vector<2x32xf32>
    %165 = vector.extract_strided_slice %162 {offsets = [0, 64], sizes = [2, 32], strides = [1, 1]} : vector<2x96xf32> to vector<2x32xf32>
    %166 = vector.extract_strided_slice %156 {offsets = [0, 96], sizes = [2, 32], strides = [1, 1]} : vector<2x128xf32> to vector<2x32xf32>
    %167 = math.tanh %166 : vector<2x32xf32>
    %168 = arith.mulf %167, %163 : vector<2x32xf32>
    %169 = arith.mulf %164, %125 : vector<2x32xf32>
    %170 = arith.addf %168, %169 : vector<2x32xf32>
    %171 = math.tanh %170 : vector<2x32xf32>
    %172 = arith.mulf %165, %171 : vector<2x32xf32>
    %173 = arith.truncf %172 : vector<2x32xf32> to vector<2x32xbf16>
    %cst_54 = arith.constant dense<0.000000e+00> : vector<2x128xf32>
    %174 = tpu.matmul %173, %4, %cst_54 {dimension_numbers = #tpu.dot_dimension_numbers<[1], [0], [0], [1], [0, 0, 1, 1], [], []>} : vector<2x32xbf16>, vector<32x128xbf16>, vector<2x128xf32> -> vector<2x128xf32>
    %175 = arith.truncf %149 : vector<2x32xf32> to vector<2x32xbf16>
    %cst_55 = arith.constant dense<0.000000e+00> : vector<2x128xf32>
    %176 = tpu.matmul %175, %5, %cst_55 {dimension_numbers = #tpu.dot_dimension_numbers<[1], [0], [0], [1], [0, 0, 1, 1], [], []>} : vector<2x32xbf16>, vector<32x128xbf16>, vector<2x128xf32> -> vector<2x128xf32>
    %177 = arith.addf %174, %176 : vector<2x128xf32>
    %178 = arith.addf %177, %8 : vector<2x128xf32>
    %179 = vector.extract_strided_slice %178 {offsets = [0, 0], sizes = [2, 96], strides = [1, 1]} : vector<2x128xf32> to vector<2x96xf32>
    %180 = arith.negf %179 : vector<2x96xf32>
    %181 = math.exp %180 : vector<2x96xf32>
    %cst_56 = arith.constant 1.000000e+00 : f32
    %182 = vector.broadcast %cst_56 : f32 to vector<2x96xf32>
    %183 = arith.addf %182, %181 : vector<2x96xf32>
    %184 = arith.divf %182, %183 : vector<2x96xf32>
    %185 = vector.extract_strided_slice %184 {offsets = [0, 0], sizes = [2, 32], strides = [1, 1]} : vector<2x96xf32> to vector<2x32xf32>
    %186 = vector.extract_strided_slice %184 {offsets = [0, 32], sizes = [2, 32], strides = [1, 1]} : vector<2x96xf32> to vector<2x32xf32>
    %187 = vector.extract_strided_slice %184 {offsets = [0, 64], sizes = [2, 32], strides = [1, 1]} : vector<2x96xf32> to vector<2x32xf32>
    %188 = vector.extract_strided_slice %178 {offsets = [0, 96], sizes = [2, 32], strides = [1, 1]} : vector<2x128xf32> to vector<2x32xf32>
    %189 = math.tanh %188 : vector<2x32xf32>
    %190 = arith.mulf %189, %185 : vector<2x32xf32>
    %191 = arith.mulf %186, %147 : vector<2x32xf32>
    %192 = arith.addf %190, %191 : vector<2x32xf32>
    %193 = math.tanh %192 : vector<2x32xf32>
    %194 = arith.mulf %187, %193 : vector<2x32xf32>
    %195 = vector.shape_cast %194 : vector<2x32xf32> to vector<2x1x32xf32>
    %c0_57 = arith.constant 0 : index
    %c3_58 = arith.constant 3 : index
    %c0_59 = arith.constant 0 : index
    %196 = vector.load %arg8[%c0_57, %c3_58, %c0_59] : memref<2x8x32xf32, #tpu.memory_space<vmem>>, vector<2x1x32xf32>
    tpu.vector_store %arg8[%c0_57, %c3_58, %c0_59], %195 {strides = array<i32>} : memref<2x8x32xf32, #tpu.memory_space<vmem>>, vector<2x1x32xf32>,
    %c4 = arith.constant 4 : index
    %c0_60 = arith.constant 0 : index
    %c0_61 = arith.constant 0 : index
    %197 = vector.load %arg2[%c4, %c0_60, %c0_61] : memref<8x2x128xf32, #tpu.memory_space<vmem>>, vector<1x2x128xf32>
    %198 = vector.shape_cast %197 : vector<1x2x128xf32> to vector<2x128xf32>
    %199 = arith.truncf %172 : vector<2x32xf32> to vector<2x32xbf16>
    %cst_62 = arith.constant dense<0.000000e+00> : vector<2x128xf32>
    %200 = tpu.matmul %199, %3, %cst_62 {dimension_numbers = #tpu.dot_dimension_numbers<[1], [0], [0], [1], [0, 0, 1, 1], [], []>} : vector<2x32xbf16>, vector<32x128xbf16>, vector<2x128xf32> -> vector<2x128xf32>
    %201 = arith.addf %198, %200 : vector<2x128xf32>
    %202 = vector.extract_strided_slice %201 {offsets = [0, 0], sizes = [2, 96], strides = [1, 1]} : vector<2x128xf32> to vector<2x96xf32>
    %203 = arith.negf %202 : vector<2x96xf32>
    %204 = math.exp %203 : vector<2x96xf32>
    %cst_63 = arith.constant 1.000000e+00 : f32
    %205 = vector.broadcast %cst_63 : f32 to vector<2x96xf32>
    %206 = arith.addf %205, %204 : vector<2x96xf32>
    %207 = arith.divf %205, %206 : vector<2x96xf32>
    %208 = vector.extract_strided_slice %207 {offsets = [0, 0], sizes = [2, 32], strides = [1, 1]} : vector<2x96xf32> to vector<2x32xf32>
    %209 = vector.extract_strided_slice %207 {offsets = [0, 32], sizes = [2, 32], strides = [1, 1]} : vector<2x96xf32> to vector<2x32xf32>
    %210 = vector.extract_strided_slice %207 {offsets = [0, 64], sizes = [2, 32], strides = [1, 1]} : vector<2x96xf32> to vector<2x32xf32>
    %211 = vector.extract_strided_slice %201 {offsets = [0, 96], sizes = [2, 32], strides = [1, 1]} : vector<2x128xf32> to vector<2x32xf32>
    %212 = math.tanh %211 : vector<2x32xf32>
    %213 = arith.mulf %212, %208 : vector<2x32xf32>
    %214 = arith.mulf %209, %170 : vector<2x32xf32>
    %215 = arith.addf %213, %214 : vector<2x32xf32>
    %216 = math.tanh %215 : vector<2x32xf32>
    %217 = arith.mulf %210, %216 : vector<2x32xf32>
    %218 = arith.truncf %217 : vector<2x32xf32> to vector<2x32xbf16>
    %cst_64 = arith.constant dense<0.000000e+00> : vector<2x128xf32>
    %219 = tpu.matmul %218, %4, %cst_64 {dimension_numbers = #tpu.dot_dimension_numbers<[1], [0], [0], [1], [0, 0, 1, 1], [], []>} : vector<2x32xbf16>, vector<32x128xbf16>, vector<2x128xf32> -> vector<2x128xf32>
    %220 = arith.truncf %194 : vector<2x32xf32> to vector<2x32xbf16>
    %cst_65 = arith.constant dense<0.000000e+00> : vector<2x128xf32>
    %221 = tpu.matmul %220, %5, %cst_65 {dimension_numbers = #tpu.dot_dimension_numbers<[1], [0], [0], [1], [0, 0, 1, 1], [], []>} : vector<2x32xbf16>, vector<32x128xbf16>, vector<2x128xf32> -> vector<2x128xf32>
    %222 = arith.addf %219, %221 : vector<2x128xf32>
    %223 = arith.addf %222, %8 : vector<2x128xf32>
    %224 = vector.extract_strided_slice %223 {offsets = [0, 0], sizes = [2, 96], strides = [1, 1]} : vector<2x128xf32> to vector<2x96xf32>
    %225 = arith.negf %224 : vector<2x96xf32>
    %226 = math.exp %225 : vector<2x96xf32>
    %cst_66 = arith.constant 1.000000e+00 : f32
    %227 = vector.broadcast %cst_66 : f32 to vector<2x96xf32>
    %228 = arith.addf %227, %226 : vector<2x96xf32>
    %229 = arith.divf %227, %228 : vector<2x96xf32>
    %230 = vector.extract_strided_slice %229 {offsets = [0, 0], sizes = [2, 32], strides = [1, 1]} : vector<2x96xf32> to vector<2x32xf32>
    %231 = vector.extract_strided_slice %229 {offsets = [0, 32], sizes = [2, 32], strides = [1, 1]} : vector<2x96xf32> to vector<2x32xf32>
    %232 = vector.extract_strided_slice %229 {offsets = [0, 64], sizes = [2, 32], strides = [1, 1]} : vector<2x96xf32> to vector<2x32xf32>
    %233 = vector.extract_strided_slice %223 {offsets = [0, 96], sizes = [2, 32], strides = [1, 1]} : vector<2x128xf32> to vector<2x32xf32>
    %234 = math.tanh %233 : vector<2x32xf32>
    %235 = arith.mulf %234, %230 : vector<2x32xf32>
    %236 = arith.mulf %231, %192 : vector<2x32xf32>
    %237 = arith.addf %235, %236 : vector<2x32xf32>
    %238 = math.tanh %237 : vector<2x32xf32>
    %239 = arith.mulf %232, %238 : vector<2x32xf32>
    %240 = vector.shape_cast %239 : vector<2x32xf32> to vector<2x1x32xf32>
    %c0_67 = arith.constant 0 : index
    %c4_68 = arith.constant 4 : index
    %c0_69 = arith.constant 0 : index
    %241 = vector.load %arg8[%c0_67, %c4_68, %c0_69] : memref<2x8x32xf32, #tpu.memory_space<vmem>>, vector<2x1x32xf32>
    tpu.vector_store %arg8[%c0_67, %c4_68, %c0_69], %240 {strides = array<i32>} : memref<2x8x32xf32, #tpu.memory_space<vmem>>, vector<2x1x32xf32>,
    %c5 = arith.constant 5 : index
    %c0_70 = arith.constant 0 : index
    %c0_71 = arith.constant 0 : index
    %242 = vector.load %arg2[%c5, %c0_70, %c0_71] : memref<8x2x128xf32, #tpu.memory_space<vmem>>, vector<1x2x128xf32>
    %243 = vector.shape_cast %242 : vector<1x2x128xf32> to vector<2x128xf32>
    %244 = arith.truncf %217 : vector<2x32xf32> to vector<2x32xbf16>
    %cst_72 = arith.constant dense<0.000000e+00> : vector<2x128xf32>
    %245 = tpu.matmul %244, %3, %cst_72 {dimension_numbers = #tpu.dot_dimension_numbers<[1], [0], [0], [1], [0, 0, 1, 1], [], []>} : vector<2x32xbf16>, vector<32x128xbf16>, vector<2x128xf32> -> vector<2x128xf32>
    %246 = arith.addf %243, %245 : vector<2x128xf32>
    %247 = vector.extract_strided_slice %246 {offsets = [0, 0], sizes = [2, 96], strides = [1, 1]} : vector<2x128xf32> to vector<2x96xf32>
    %248 = arith.negf %247 : vector<2x96xf32>
    %249 = math.exp %248 : vector<2x96xf32>
    %cst_73 = arith.constant 1.000000e+00 : f32
    %250 = vector.broadcast %cst_73 : f32 to vector<2x96xf32>
    %251 = arith.addf %250, %249 : vector<2x96xf32>
    %252 = arith.divf %250, %251 : vector<2x96xf32>
    %253 = vector.extract_strided_slice %252 {offsets = [0, 0], sizes = [2, 32], strides = [1, 1]} : vector<2x96xf32> to vector<2x32xf32>
    %254 = vector.extract_strided_slice %252 {offsets = [0, 32], sizes = [2, 32], strides = [1, 1]} : vector<2x96xf32> to vector<2x32xf32>
    %255 = vector.extract_strided_slice %252 {offsets = [0, 64], sizes = [2, 32], strides = [1, 1]} : vector<2x96xf32> to vector<2x32xf32>
    %256 = vector.extract_strided_slice %246 {offsets = [0, 96], sizes = [2, 32], strides = [1, 1]} : vector<2x128xf32> to vector<2x32xf32>
    %257 = math.tanh %256 : vector<2x32xf32>
    %258 = arith.mulf %257, %253 : vector<2x32xf32>
    %259 = arith.mulf %254, %215 : vector<2x32xf32>
    %260 = arith.addf %258, %259 : vector<2x32xf32>
    %261 = math.tanh %260 : vector<2x32xf32>
    %262 = arith.mulf %255, %261 : vector<2x32xf32>
    %263 = arith.truncf %262 : vector<2x32xf32> to vector<2x32xbf16>
    %cst_74 = arith.constant dense<0.000000e+00> : vector<2x128xf32>
    %264 = tpu.matmul %263, %4, %cst_74 {dimension_numbers = #tpu.dot_dimension_numbers<[1], [0], [0], [1], [0, 0, 1, 1], [], []>} : vector<2x32xbf16>, vector<32x128xbf16>, vector<2x128xf32> -> vector<2x128xf32>
    %265 = arith.truncf %239 : vector<2x32xf32> to vector<2x32xbf16>
    %cst_75 = arith.constant dense<0.000000e+00> : vector<2x128xf32>
    %266 = tpu.matmul %265, %5, %cst_75 {dimension_numbers = #tpu.dot_dimension_numbers<[1], [0], [0], [1], [0, 0, 1, 1], [], []>} : vector<2x32xbf16>, vector<32x128xbf16>, vector<2x128xf32> -> vector<2x128xf32>
    %267 = arith.addf %264, %266 : vector<2x128xf32>
    %268 = arith.addf %267, %8 : vector<2x128xf32>
    %269 = vector.extract_strided_slice %268 {offsets = [0, 0], sizes = [2, 96], strides = [1, 1]} : vector<2x128xf32> to vector<2x96xf32>
    %270 = arith.negf %269 : vector<2x96xf32>
    %271 = math.exp %270 : vector<2x96xf32>
    %cst_76 = arith.constant 1.000000e+00 : f32
    %272 = vector.broadcast %cst_76 : f32 to vector<2x96xf32>
    %273 = arith.addf %272, %271 : vector<2x96xf32>
    %274 = arith.divf %272, %273 : vector<2x96xf32>
    %275 = vector.extract_strided_slice %274 {offsets = [0, 0], sizes = [2, 32], strides = [1, 1]} : vector<2x96xf32> to vector<2x32xf32>
    %276 = vector.extract_strided_slice %274 {offsets = [0, 32], sizes = [2, 32], strides = [1, 1]} : vector<2x96xf32> to vector<2x32xf32>
    %277 = vector.extract_strided_slice %274 {offsets = [0, 64], sizes = [2, 32], strides = [1, 1]} : vector<2x96xf32> to vector<2x32xf32>
    %278 = vector.extract_strided_slice %268 {offsets = [0, 96], sizes = [2, 32], strides = [1, 1]} : vector<2x128xf32> to vector<2x32xf32>
    %279 = math.tanh %278 : vector<2x32xf32>
    %280 = arith.mulf %279, %275 : vector<2x32xf32>
    %281 = arith.mulf %276, %237 : vector<2x32xf32>
    %282 = arith.addf %280, %281 : vector<2x32xf32>
    %283 = math.tanh %282 : vector<2x32xf32>
    %284 = arith.mulf %277, %283 : vector<2x32xf32>
    %285 = vector.shape_cast %284 : vector<2x32xf32> to vector<2x1x32xf32>
    %c0_77 = arith.constant 0 : index
    %c5_78 = arith.constant 5 : index
    %c0_79 = arith.constant 0 : index
    %286 = vector.load %arg8[%c0_77, %c5_78, %c0_79] : memref<2x8x32xf32, #tpu.memory_space<vmem>>, vector<2x1x32xf32>
    tpu.vector_store %arg8[%c0_77, %c5_78, %c0_79], %285 {strides = array<i32>} : memref<2x8x32xf32, #tpu.memory_space<vmem>>, vector<2x1x32xf32>,
    %c6 = arith.constant 6 : index
    %c0_80 = arith.constant 0 : index
    %c0_81 = arith.constant 0 : index
    %287 = vector.load %arg2[%c6, %c0_80, %c0_81] : memref<8x2x128xf32, #tpu.memory_space<vmem>>, vector<1x2x128xf32>
    %288 = vector.shape_cast %287 : vector<1x2x128xf32> to vector<2x128xf32>
    %289 = arith.truncf %262 : vector<2x32xf32> to vector<2x32xbf16>
    %cst_82 = arith.constant dense<0.000000e+00> : vector<2x128xf32>
    %290 = tpu.matmul %289, %3, %cst_82 {dimension_numbers = #tpu.dot_dimension_numbers<[1], [0], [0], [1], [0, 0, 1, 1], [], []>} : vector<2x32xbf16>, vector<32x128xbf16>, vector<2x128xf32> -> vector<2x128xf32>
    %291 = arith.addf %288, %290 : vector<2x128xf32>
    %292 = vector.extract_strided_slice %291 {offsets = [0, 0], sizes = [2, 96], strides = [1, 1]} : vector<2x128xf32> to vector<2x96xf32>
    %293 = arith.negf %292 : vector<2x96xf32>
    %294 = math.exp %293 : vector<2x96xf32>
    %cst_83 = arith.constant 1.000000e+00 : f32
    %295 = vector.broadcast %cst_83 : f32 to vector<2x96xf32>
    %296 = arith.addf %295, %294 : vector<2x96xf32>
    %297 = arith.divf %295, %296 : vector<2x96xf32>
    %298 = vector.extract_strided_slice %297 {offsets = [0, 0], sizes = [2, 32], strides = [1, 1]} : vector<2x96xf32> to vector<2x32xf32>
    %299 = vector.extract_strided_slice %297 {offsets = [0, 32], sizes = [2, 32], strides = [1, 1]} : vector<2x96xf32> to vector<2x32xf32>
    %300 = vector.extract_strided_slice %297 {offsets = [0, 64], sizes = [2, 32], strides = [1, 1]} : vector<2x96xf32> to vector<2x32xf32>
    %301 = vector.extract_strided_slice %291 {offsets = [0, 96], sizes = [2, 32], strides = [1, 1]} : vector<2x128xf32> to vector<2x32xf32>
    %302 = math.tanh %301 : vector<2x32xf32>
    %303 = arith.mulf %302, %298 : vector<2x32xf32>
    %304 = arith.mulf %299, %260 : vector<2x32xf32>
    %305 = arith.addf %303, %304 : vector<2x32xf32>
    %306 = math.tanh %305 : vector<2x32xf32>
    %307 = arith.mulf %300, %306 : vector<2x32xf32>
    %308 = arith.truncf %307 : vector<2x32xf32> to vector<2x32xbf16>
    %cst_84 = arith.constant dense<0.000000e+00> : vector<2x128xf32>
    %309 = tpu.matmul %308, %4, %cst_84 {dimension_numbers = #tpu.dot_dimension_numbers<[1], [0], [0], [1], [0, 0, 1, 1], [], []>} : vector<2x32xbf16>, vector<32x128xbf16>, vector<2x128xf32> -> vector<2x128xf32>
    %310 = arith.truncf %284 : vector<2x32xf32> to vector<2x32xbf16>
    %cst_85 = arith.constant dense<0.000000e+00> : vector<2x128xf32>
    %311 = tpu.matmul %310, %5, %cst_85 {dimension_numbers = #tpu.dot_dimension_numbers<[1], [0], [0], [1], [0, 0, 1, 1], [], []>} : vector<2x32xbf16>, vector<32x128xbf16>, vector<2x128xf32> -> vector<2x128xf32>
    %312 = arith.addf %309, %311 : vector<2x128xf32>
    %313 = arith.addf %312, %8 : vector<2x128xf32>
    %314 = vector.extract_strided_slice %313 {offsets = [0, 0], sizes = [2, 96], strides = [1, 1]} : vector<2x128xf32> to vector<2x96xf32>
    %315 = arith.negf %314 : vector<2x96xf32>
    %316 = math.exp %315 : vector<2x96xf32>
    %cst_86 = arith.constant 1.000000e+00 : f32
    %317 = vector.broadcast %cst_86 : f32 to vector<2x96xf32>
    %318 = arith.addf %317, %316 : vector<2x96xf32>
    %319 = arith.divf %317, %318 : vector<2x96xf32>
    %320 = vector.extract_strided_slice %319 {offsets = [0, 0], sizes = [2, 32], strides = [1, 1]} : vector<2x96xf32> to vector<2x32xf32>
    %321 = vector.extract_strided_slice %319 {offsets = [0, 32], sizes = [2, 32], strides = [1, 1]} : vector<2x96xf32> to vector<2x32xf32>
    %322 = vector.extract_strided_slice %319 {offsets = [0, 64], sizes = [2, 32], strides = [1, 1]} : vector<2x96xf32> to vector<2x32xf32>
    %323 = vector.extract_strided_slice %313 {offsets = [0, 96], sizes = [2, 32], strides = [1, 1]} : vector<2x128xf32> to vector<2x32xf32>
    %324 = math.tanh %323 : vector<2x32xf32>
    %325 = arith.mulf %324, %320 : vector<2x32xf32>
    %326 = arith.mulf %321, %282 : vector<2x32xf32>
    %327 = arith.addf %325, %326 : vector<2x32xf32>
    %328 = math.tanh %327 : vector<2x32xf32>
    %329 = arith.mulf %322, %328 : vector<2x32xf32>
    %330 = vector.shape_cast %329 : vector<2x32xf32> to vector<2x1x32xf32>
    %c0_87 = arith.constant 0 : index
    %c6_88 = arith.constant 6 : index
    %c0_89 = arith.constant 0 : index
    %331 = vector.load %arg8[%c0_87, %c6_88, %c0_89] : memref<2x8x32xf32, #tpu.memory_space<vmem>>, vector<2x1x32xf32>
    tpu.vector_store %arg8[%c0_87, %c6_88, %c0_89], %330 {strides = array<i32>} : memref<2x8x32xf32, #tpu.memory_space<vmem>>, vector<2x1x32xf32>,
    %c7 = arith.constant 7 : index
    %c0_90 = arith.constant 0 : index
    %c0_91 = arith.constant 0 : index
    %332 = vector.load %arg2[%c7, %c0_90, %c0_91] : memref<8x2x128xf32, #tpu.memory_space<vmem>>, vector<1x2x128xf32>
    %333 = vector.shape_cast %332 : vector<1x2x128xf32> to vector<2x128xf32>
    %334 = arith.truncf %307 : vector<2x32xf32> to vector<2x32xbf16>
    %cst_92 = arith.constant dense<0.000000e+00> : vector<2x128xf32>
    %335 = tpu.matmul %334, %3, %cst_92 {dimension_numbers = #tpu.dot_dimension_numbers<[1], [0], [0], [1], [0, 0, 1, 1], [], []>} : vector<2x32xbf16>, vector<32x128xbf16>, vector<2x128xf32> -> vector<2x128xf32>
    %336 = arith.addf %333, %335 : vector<2x128xf32>
    %337 = vector.extract_strided_slice %336 {offsets = [0, 0], sizes = [2, 96], strides = [1, 1]} : vector<2x128xf32> to vector<2x96xf32>
    %338 = arith.negf %337 : vector<2x96xf32>
    %339 = math.exp %338 : vector<2x96xf32>
    %cst_93 = arith.constant 1.000000e+00 : f32
    %340 = vector.broadcast %cst_93 : f32 to vector<2x96xf32>
    %341 = arith.addf %340, %339 : vector<2x96xf32>
    %342 = arith.divf %340, %341 : vector<2x96xf32>
    %343 = vector.extract_strided_slice %342 {offsets = [0, 0], sizes = [2, 32], strides = [1, 1]} : vector<2x96xf32> to vector<2x32xf32>
    %344 = vector.extract_strided_slice %342 {offsets = [0, 32], sizes = [2, 32], strides = [1, 1]} : vector<2x96xf32> to vector<2x32xf32>
    %345 = vector.extract_strided_slice %342 {offsets = [0, 64], sizes = [2, 32], strides = [1, 1]} : vector<2x96xf32> to vector<2x32xf32>
    %346 = vector.extract_strided_slice %336 {offsets = [0, 96], sizes = [2, 32], strides = [1, 1]} : vector<2x128xf32> to vector<2x32xf32>
    %347 = math.tanh %346 : vector<2x32xf32>
    %348 = arith.mulf %347, %343 : vector<2x32xf32>
    %349 = arith.mulf %344, %305 : vector<2x32xf32>
    %350 = arith.addf %348, %349 : vector<2x32xf32>
    %351 = math.tanh %350 : vector<2x32xf32>
    %352 = arith.mulf %345, %351 : vector<2x32xf32>
    %353 = arith.truncf %352 : vector<2x32xf32> to vector<2x32xbf16>
    %cst_94 = arith.constant dense<0.000000e+00> : vector<2x128xf32>
    %354 = tpu.matmul %353, %4, %cst_94 {dimension_numbers = #tpu.dot_dimension_numbers<[1], [0], [0], [1], [0, 0, 1, 1], [], []>} : vector<2x32xbf16>, vector<32x128xbf16>, vector<2x128xf32> -> vector<2x128xf32>
    %355 = arith.truncf %329 : vector<2x32xf32> to vector<2x32xbf16>
    %cst_95 = arith.constant dense<0.000000e+00> : vector<2x128xf32>
    %356 = tpu.matmul %355, %5, %cst_95 {dimension_numbers = #tpu.dot_dimension_numbers<[1], [0], [0], [1], [0, 0, 1, 1], [], []>} : vector<2x32xbf16>, vector<32x128xbf16>, vector<2x128xf32> -> vector<2x128xf32>
    %357 = arith.addf %354, %356 : vector<2x128xf32>
    %358 = arith.addf %357, %8 : vector<2x128xf32>
    %359 = vector.extract_strided_slice %358 {offsets = [0, 0], sizes = [2, 96], strides = [1, 1]} : vector<2x128xf32> to vector<2x96xf32>
    %360 = arith.negf %359 : vector<2x96xf32>
    %361 = math.exp %360 : vector<2x96xf32>
    %cst_96 = arith.constant 1.000000e+00 : f32
    %362 = vector.broadcast %cst_96 : f32 to vector<2x96xf32>
    %363 = arith.addf %362, %361 : vector<2x96xf32>
    %364 = arith.divf %362, %363 : vector<2x96xf32>
    %365 = vector.extract_strided_slice %364 {offsets = [0, 0], sizes = [2, 32], strides = [1, 1]} : vector<2x96xf32> to vector<2x32xf32>
    %366 = vector.extract_strided_slice %364 {offsets = [0, 32], sizes = [2, 32], strides = [1, 1]} : vector<2x96xf32> to vector<2x32xf32>
    %367 = vector.extract_strided_slice %364 {offsets = [0, 64], sizes = [2, 32], strides = [1, 1]} : vector<2x96xf32> to vector<2x32xf32>
    %368 = vector.extract_strided_slice %358 {offsets = [0, 96], sizes = [2, 32], strides = [1, 1]} : vector<2x128xf32> to vector<2x32xf32>
    %369 = math.tanh %368 : vector<2x32xf32>
    %370 = arith.mulf %369, %365 : vector<2x32xf32>
    %371 = arith.mulf %366, %327 : vector<2x32xf32>
    %372 = arith.addf %370, %371 : vector<2x32xf32>
    %373 = math.tanh %372 : vector<2x32xf32>
    %374 = arith.mulf %367, %373 : vector<2x32xf32>
    %375 = vector.shape_cast %374 : vector<2x32xf32> to vector<2x1x32xf32>
    %c0_97 = arith.constant 0 : index
    %c7_98 = arith.constant 7 : index
    %c0_99 = arith.constant 0 : index
    %376 = vector.load %arg8[%c0_97, %c7_98, %c0_99] : memref<2x8x32xf32, #tpu.memory_space<vmem>>, vector<2x1x32xf32>
    tpu.vector_store %arg8[%c0_97, %c7_98, %c0_99], %375 {strides = array<i32>} : memref<2x8x32xf32, #tpu.memory_space<vmem>>, vector<2x1x32xf32>,
    %c0_100 = arith.constant 0 : index
    %c0_101 = arith.constant 0 : index
    %c0_102 = arith.constant 0 : index
    %377 = vector.load %arg9[%c0_100, %c0_101, %c0_102] : memref<4x2x32xf32, #tpu.memory_space<vmem>>, vector<1x2x32xf32>
    %378 = vector.shape_cast %377 : vector<1x2x32xf32> to vector<2x32xf32>
    %379 = vector.shape_cast %352 : vector<2x32xf32> to vector<1x2x32xf32>
    tpu.vector_store %arg9[%c0_100, %c0_101, %c0_102], %379 {strides = array<i32>} : memref<4x2x32xf32, #tpu.memory_space<vmem>>, vector<1x2x32xf32>,
    %c1_103 = arith.constant 1 : index
    %c0_104 = arith.constant 0 : index
    %c0_105 = arith.constant 0 : index
    %380 = vector.load %arg9[%c1_103, %c0_104, %c0_105] : memref<4x2x32xf32, #tpu.memory_space<vmem>>, vector<1x2x32xf32>
    %381 = vector.shape_cast %380 : vector<1x2x32xf32> to vector<2x32xf32>
    %382 = vector.shape_cast %350 : vector<2x32xf32> to vector<1x2x32xf32>
    tpu.vector_store %arg9[%c1_103, %c0_104, %c0_105], %382 {strides = array<i32>} : memref<4x2x32xf32, #tpu.memory_space<vmem>>, vector<1x2x32xf32>,
    %c2_106 = arith.constant 2 : index
    %c0_107 = arith.constant 0 : index
    %c0_108 = arith.constant 0 : index
    %383 = vector.load %arg9[%c2_106, %c0_107, %c0_108] : memref<4x2x32xf32, #tpu.memory_space<vmem>>, vector<1x2x32xf32>
    %384 = vector.shape_cast %383 : vector<1x2x32xf32> to vector<2x32xf32>
    %385 = vector.shape_cast %374 : vector<2x32xf32> to vector<1x2x32xf32>
    tpu.vector_store %arg9[%c2_106, %c0_107, %c0_108], %385 {strides = array<i32>} : memref<4x2x32xf32, #tpu.memory_space<vmem>>, vector<1x2x32xf32>,
    %c3_109 = arith.constant 3 : index
    %c0_110 = arith.constant 0 : index
    %c0_111 = arith.constant 0 : index
    %386 = vector.load %arg9[%c3_109, %c0_110, %c0_111] : memref<4x2x32xf32, #tpu.memory_space<vmem>>, vector<1x2x32xf32>
    %387 = vector.shape_cast %386 : vector<1x2x32xf32> to vector<2x32xf32>
    %388 = vector.shape_cast %372 : vector<2x32xf32> to vector<1x2x32xf32>
    tpu.vector_store %arg9[%c3_109, %c0_110, %c0_111], %388 {strides = array<i32>} : memref<4x2x32xf32, #tpu.memory_space<vmem>>, vector<1x2x32xf32>,
    return
  }
  func.func @transform_0(%arg0: i32, %arg1: i32) -> (i32, i32, i32) {
    %c0_i32 = arith.constant 0 : i32
    %c0_i32_0 = arith.constant 0 : i32
    return %arg1, %arg0, %c0_i32 : i32, i32, i32
  }
  func.func @transform_1(%arg0: i32, %arg1: i32) -> (i32, i32, i32) {
    %c0_i32 = arith.constant 0 : i32
    %c0_i32_0 = arith.constant 0 : i32
    %c0_i32_1 = arith.constant 0 : i32
    return %c0_i32, %arg0, %c0_i32_0 : i32, i32, i32
  }
  func.func @transform_2(%arg0: i32, %arg1: i32) -> (i32, i32) {
    %c0_i32 = arith.constant 0 : i32
    %c0_i32_0 = arith.constant 0 : i32
    %c0_i32_1 = arith.constant 0 : i32
    return %c0_i32, %c0_i32_0 : i32, i32
  }
  func.func @transform_3(%arg0: i32, %arg1: i32) -> (i32, i32) {
    %c0_i32 = arith.constant 0 : i32
    %c0_i32_0 = arith.constant 0 : i32
    %c0_i32_1 = arith.constant 0 : i32
    return %c0_i32, %c0_i32_0 : i32, i32
  }
  func.func @transform_4(%arg0: i32, %arg1: i32) -> (i32, i32) {
    %c0_i32 = arith.constant 0 : i32
    %c0_i32_0 = arith.constant 0 : i32
    %c0_i32_1 = arith.constant 0 : i32
    return %c0_i32, %c0_i32_0 : i32, i32
  }
  func.func @transform_5(%arg0: i32, %arg1: i32) -> (i32, i32) {
    %c0_i32 = arith.constant 0 : i32
    %c0_i32_0 = arith.constant 0 : i32
    %c0_i32_1 = arith.constant 0 : i32
    return %c0_i32, %c0_i32_0 : i32, i32
  }
  func.func @transform_6(%arg0: i32, %arg1: i32) -> (i32, i32, i32) {
    %c0_i32 = arith.constant 0 : i32
    %c0_i32_0 = arith.constant 0 : i32
    return %arg0, %arg1, %c0_i32 : i32, i32, i32
  }
  func.func @transform_7(%arg0: i32, %arg1: i32) -> (i32, i32, i32) {
    %c0_i32 = arith.constant 0 : i32
    %c0_i32_0 = arith.constant 0 : i32
    %c0_i32_1 = arith.constant 0 : i32
    return %c0_i32, %arg0, %c0_i32_0 : i32, i32, i32
  }
}

</mosaic_0001>

<llo_original>
// kernel: tpu_custom_call.1
$region0: #{tpu_custom_call.1}
  #allocation0 [shape = 'u32[]', space=smem, size = 0x4, offset = 0x4, fixed_abs, tag = 'smem constant byte address 0x4 - core index']
  #allocation1 [shape = 'u32[72,128]{1,0:T(1,128)}', space=vmem, size = 0x9000, scoped, tag = 'internal scratch']
  %s0 = inlined_call_operand.hbm [shape: f32[8,2,128], index: 0, kind: input, shape index: {}]
  %s1 = inlined_call_operand.hbm [shape: f32[4,2,32], index: 1, kind: input, shape index: {}]
  %s2 = inlined_call_operand.hbm [shape: bf16[32,128], index: 2, kind: input, shape index: {}]
  %s3 = inlined_call_operand.hbm [shape: bf16[32,128], index: 3, kind: input, shape index: {}]
  %s4 = inlined_call_operand.hbm [shape: bf16[32,128], index: 4, kind: input, shape index: {}]
  %s5 = inlined_call_operand.vmem [shape: f32[1,128], index: 5, kind: input, shape index: {}]
  %s6 = inlined_call_operand.hbm [shape: f32[2,8,32], index: 6, kind: output, shape index: {0}]
  %s7 = inlined_call_operand.hbm [shape: f32[4,2,32], index: 7, kind: output, shape index: {1}]
  %8 = xla_tuple %s6, %s7
  %s9 = sld [smem:[#allocation0]]
  $region66: #{tpu_custom_call.1} parent=0
    _
  %s11 = ssub.s32 1, %s9
  %s12 = scalar_select 0, %s11, %s9
  $region1: #{tpu_custom_call.1} parent=0
    #allocation2 [shape = 'u8[8192]{0}', space=vmem, size = 0x2000, scoped, tag = 'input window, operand 0, single buffered']
    #allocation3 [shape = 's32[1]{0}', space=sflag, size = 0x4, scoped, tag = 'scoped memory for tpu_custom_call.1']
    #allocation4 [shape = 's32[1]{0}', space=sflag, size = 0x4, scoped, tag = 'scoped memory for tpu_custom_call.1']
    #allocation5 [shape = 'u8[4096]{0}', space=vmem, size = 0x1000, scoped, tag = 'input window, operand 1, single buffered']
    #allocation6 [shape = 's32[1]{0}', space=sflag, size = 0x4, scoped, tag = 'scoped memory for tpu_custom_call.1']
    #allocation7 [shape = 'u8[8192]{0}', space=vmem, size = 0x2000, scoped, tag = 'input window, operand 2, single buffered']
    #allocation8 [shape = 'u8[8192]{0}', space=vmem, size = 0x2000, scoped, tag = 'input window, operand 3, single buffered']
    #allocation9 [shape = 's32[1]{0}', space=sflag, size = 0x4, scoped, tag = 'scoped memory for tpu_custom_call.1']
    #allocation10 [shape = 'u8[8192]{0}', space=vmem, size = 0x2000, scoped, tag = 'input window, operand 4, single buffered']
    #allocation11 [shape = 'u8[8192]{0}', space=vmem, size = 0x2000, scoped, tag = 'output window, operand 0, single buffered']
    #allocation12 [shape = 'u8[4096]{0}', space=vmem, size = 0x1000, scoped, tag = 'output window, operand 1, single buffered']
    #allocation13 [shape = 's32[1]{0}', space=sflag, size = 0x4, scoped, tag = 'scoped memory for tpu_custom_call.1']
    %13 = vsyncpa [#allocation3], 0
    %14 = vsyncpa [#allocation6], 0
    %15 = vsyncpa [#allocation9], 0
    %16 = vsyncpa [#allocation4], 0
    %17 = vsyncpa [#allocation13], 0
    // Predicated region
    $region2: #{tpu_custom_call.1} parent=1 // pred_check
      _
    $region3: #{tpu_custom_call.1} parent=1 // pred_check_branch
      %19 = sbr.rel (0) target = $region5
    $region4: #{tpu_custom_call.1} parent=1 // pred_region
      %21 = vsyncadd [#allocation3], 0
      %s22 = sshll.u32 %s0, 4
      %s23 = int_to_ptr.hbm [resolvable:$true] %s22
      %s24 = sshll.u32 [#allocation2], 4
      %s25 = int_to_ptr.vmem [resolvable:$true] %s24
      %30 = dma.hbm_to_vmem [thread:$0]  %s23, 256, %s25, [#allocation3], 32, 32, 2
    $region5: #{tpu_custom_call.1} parent=1 // pred_fallthru
      _
    // Predicated region
    $region6: #{tpu_custom_call.1} parent=1 // pred_check
      _
    $region7: #{tpu_custom_call.1} parent=1 // pred_check_branch
      %32 = sbr.rel (0) target = $region9
    $region8: #{tpu_custom_call.1} parent=1 // pred_region
      %34 = vsyncadd [#allocation6], 0
      %s35 = sshll.u32 %s1, 4
      %s36 = int_to_ptr.hbm [resolvable:$true] %s35
      %s37 = sshll.u32 [#allocation5], 4
      %s38 = int_to_ptr.vmem [resolvable:$true] %s37
      %43 = dma.hbm_to_vmem [thread:$0]  %s36, 128, %s38, [#allocation6], 32, 32, 2
    $region9: #{tpu_custom_call.1} parent=1 // pred_fallthru
      _
    // Predicated region
    $region10: #{tpu_custom_call.1} parent=1 // pred_check
      _
    $region11: #{tpu_custom_call.1} parent=1 // pred_check_branch
      %45 = sbr.rel (0) target = $region13
    $region12: #{tpu_custom_call.1} parent=1 // pred_region
      %47 = vsyncadd [#allocation6], 0
      %s48 = sshll.u32 %s2, 4
      %s49 = int_to_ptr.hbm [resolvable:$true] %s48
      %s50 = sshll.u32 [#allocation7], 4
      %s51 = int_to_ptr.vmem [resolvable:$true] %s50
      %56 = dma.hbm_to_vmem [thread:$0]  %s49, 256, %s51, [#allocation6], 64, 64, 4
    $region13: #{tpu_custom_call.1} parent=1 // pred_fallthru
      _
    // Predicated region
    $region14: #{tpu_custom_call.1} parent=1 // pred_check
      _
    $region15: #{tpu_custom_call.1} parent=1 // pred_check_branch
      %58 = sbr.rel (0) target = $region17
    $region16: #{tpu_custom_call.1} parent=1 // pred_region
      %60 = vsyncadd [#allocation9], 0
      %s61 = sshll.u32 %s3, 4
      %s62 = int_to_ptr.hbm [resolvable:$true] %s61
      %s63 = sshll.u32 [#allocation8], 4
      %s64 = int_to_ptr.vmem [resolvable:$true] %s63
      %69 = dma.hbm_to_vmem [thread:$0]  %s62, 256, %s64, [#allocation9], 64, 64, 4
    $region17: #{tpu_custom_call.1} parent=1 // pred_fallthru
      _
    // Predicated region
    $region18: #{tpu_custom_call.1} parent=1 // pred_check
      _
    $region19: #{tpu_custom_call.1} parent=1 // pred_check_branch
      %71 = sbr.rel (0) target = $region21
    $region20: #{tpu_custom_call.1} parent=1 // pred_region
      %73 = vsyncadd [#allocation9], 0
      %s74 = sshll.u32 %s4, 4
      %s75 = int_to_ptr.hbm [resolvable:$true] %s74
      %s76 = sshll.u32 [#allocation10], 4
      %s77 = int_to_ptr.vmem [resolvable:$true] %s76
      %82 = dma.hbm_to_vmem [thread:$0]  %s75, 256, %s77, [#allocation9], 64, 64, 4
    $region21: #{tpu_custom_call.1} parent=1 // pred_fallthru
      _
    // Predicated region
    $region22: #{tpu_custom_call.1} parent=1 // pred_check
      _
    $region23: #{tpu_custom_call.1} parent=1 // pred_check_branch
      %84 = sbr.rel (0) target = $region25
    $region24: #{tpu_custom_call.1} parent=1 // pred_region
      _
    $region25: #{tpu_custom_call.1} parent=1 // pred_fallthru
      _
    // Predicated region
    $region26: #{tpu_custom_call.1} parent=1 // pred_check
      _
    $region27: #{tpu_custom_call.1} parent=1 // pred_check_branch
      %86 = sbr.rel (0) target = $region29
    $region28: #{tpu_custom_call.1} parent=1 // pred_region
      %88 = dma.done [#allocation3], 256
    $region29: #{tpu_custom_call.1} parent=1 // pred_fallthru
      _
    // Predicated region
    $region30: #{tpu_custom_call.1} parent=1 // pred_check
      _
    $region31: #{tpu_custom_call.1} parent=1 // pred_check_branch
      %90 = sbr.rel (0) target = $region33
    $region32: #{tpu_custom_call.1} parent=1 // pred_region
      %92 = dma.done [#allocation6], 128
    $region33: #{tpu_custom_call.1} parent=1 // pred_fallthru
      _
    // Predicated region
    $region34: #{tpu_custom_call.1} parent=1 // pred_check
      _
    $region35: #{tpu_custom_call.1} parent=1 // pred_check_branch
      %94 = sbr.rel (0) target = $region37
    $region36: #{tpu_custom_call.1} parent=1 // pred_region
      %96 = dma.done [#allocation6], 256
    $region37: #{tpu_custom_call.1} parent=1 // pred_fallthru
      _
    // Predicated region
    $region38: #{tpu_custom_call.1} parent=1 // pred_check
      _
    $region39: #{tpu_custom_call.1} parent=1 // pred_check_branch
      %98 = sbr.rel (0) target = $region41
    $region40: #{tpu_custom_call.1} parent=1 // pred_region
      %100 = dma.done [#allocation9], 256
    $region41: #{tpu_custom_call.1} parent=1 // pred_fallthru
      _
    // Predicated region
    $region42: #{tpu_custom_call.1} parent=1 // pred_check
      _
    $region43: #{tpu_custom_call.1} parent=1 // pred_check_branch
      %102 = sbr.rel (0) target = $region45
    $region44: #{tpu_custom_call.1} parent=1 // pred_region
      %104 = dma.done [#allocation9], 256
    $region45: #{tpu_custom_call.1} parent=1 // pred_fallthru
      _
    %p106 = scmp.eq.s32.totalorder 0, 0
    // Predicated region
    $region46: #{tpu_custom_call.1} parent=1 // pred_check
      %p107 = pneg %p106
    $region47: #{tpu_custom_call.1} parent=1 // pred_check_branch
      %109 = sbr.rel (%p107) target = $region49
    $region48: #{tpu_custom_call.1} parent=1 // pred_region
      %v110 = vld [vmem:[#allocation5] sm:$0x3]
      %v111 = vld [vmem:[#allocation5 + $0x2] sm:$0x3]
      %v112 = vld [vmem:[#allocation5 + $0x4] sm:$0x3]
      %v113 = vld [vmem:[#allocation5 + $0x6] sm:$0x3]
      %vm114 = vcmask 254976
      %115 = vst.msk [vmem:[#allocation12] sm:$0x3] %vm114, %v110
      %116 = vst.msk [vmem:[#allocation12 + $0x2] sm:$0x3] %vm114, %v111
      %117 = vst.msk [vmem:[#allocation12 + $0x4] sm:$0x3] %vm114, %v112
      %118 = vst.msk [vmem:[#allocation12 + $0x6] sm:$0x3] %vm114, %v113
    $region49: #{tpu_custom_call.1} parent=1 // pred_fallthru
      _
    %v119 = vld [vmem:[#allocation7] sm:$0xf]
    %v120 = vld [vmem:[#allocation7 + $0x4] sm:$0xf]
    %v121 = vld [vmem:[#allocation7 + $0x8] sm:$0xf]
    %v122 = vld [vmem:[#allocation7 + $0xc] sm:$0xf]
    %v123 = vld [vmem:[#allocation8] sm:$0xf]
    %v124 = vld [vmem:[#allocation8 + $0x4] sm:$0xf]
    %v125 = vld [vmem:[#allocation8 + $0x8] sm:$0xf]
    %v126 = vld [vmem:[#allocation8 + $0xc] sm:$0xf]
    %v127 = vld [vmem:[#allocation10] sm:$0xf]
    %v128 = vld [vmem:[#allocation10 + $0x4] sm:$0xf]
    %v129 = vld [vmem:[#allocation10 + $0x8] sm:$0xf]
    %v130 = vld [vmem:[#allocation10 + $0xc] sm:$0xf]
    %v131 = vld [vmem:[%s5] sm:$0x1]
    %v133 = vperm.slane %v131, 0
    %v135 = vld [vmem:[#allocation12] sm:$0x3]
    %s136 = scalar_lea.vmem [#allocation12], 2
    %v137 = vld [vmem:[%s136] sm:$0x3]
    %s138 = scalar_lea.vmem [#allocation12], 4
    %v139 = vld [vmem:[%s138] sm:$0x3]
    %s140 = scalar_lea.vmem [#allocation12], 6
    %v141 = vld [vmem:[%s140] sm:$0x3]
    %v142 = vld [vmem:[#allocation2] sm:$0x3]
    %v143 = vpack.c.bf16 %v135, %v135
    %v148 = vunpack.c.l.b16 %v119
    %v149 = vunpack.c.l.b16 %v120
    %v150 = vunpack.c.l.b16 %v121
    %v151 = vunpack.c.l.b16 %v122
    %v152 = vpack.c.b16 %v149, %v148
    %v153 = vpack.c.b16 %v151, %v150
    %vm156 = vcmask 261120
    %v158 = vsel %vm156, %v143, 0
    %160 = vmatpush.bf16.msra.mxu0 0
    %161 = vmatpush.bf16.msra.mxu0 0
    %162 = vmatpush.bf16.msra.mxu0 0
    %163 = vmatpush.bf16.msra.mxu0 0
    %164 = vmatpush.bf16.msra.mxu0 0
    %165 = vmatpush.bf16.msra.mxu0 0
    %166 = vmatpush.bf16.msra.mxu0 %v153
    %167 = vmatpush.bf16.msra.mxu0 %v152
    %168 = vmatmul.bf16.gmra.mxu0 %v158
    %v169 = vpop.f32.mrf.mxu0
    %v170 = vadd.f32 0.0, %v169
    %v171 = vpop.f32.mrf.mxu0
    %172 = vdwg.mxu0
    %v173 = vadd.f32 %v142, %v170
    %v174 = vxor.u32 %v173, 2147483648
    %v175 = vmul.f32 %v174, 1.442695
    %v176 = vpow.pop %v175
    %v177 = vadd.f32 %v176, 1.0
    %v178 = vrcp.pop %v177
    %v179 = vmul.f32 %v177, %v178
    %v180 = vsub.f32 1.0, %v179
    %v181 = vmul.f32 %v178, %v180
    %v182 = vadd.f32 %v178, %v181
    %vm183 = vweird.f32 %v177
    %vm184 = vweird.f32 %v178
    %vm185 = vmor %vm183, %vm184
    %v186 = vsel %vm185, %v178, %v182
    %v187 = vand.u32 2147483647, %v177
    %vm188 = vcmp.eq.f32.partialorder %v187, 8.507059e+37
    %v189 = vand.u32 %v177, 2147483648
    %v190 = vor.u32 1.1754944e-38, %v189
    %v191 = vsel %vm188, %v190, %v186
    %v192 = vmul.f32 1.0, %v191
    %v193 = vtanh.pop %v173
    %195 = vrot.lane.b32.xlu0 %v192, 96
    %v196 = vpop.permute.xlu0 %195
    %v198 = vmul.f32 %v193, %v196
    %200 = vrot.lane.b32.xlu0 %v137, 32
    %v201 = vpop.permute.xlu0 %200
    %v203 = vmul.f32 %v192, %v201
    %205 = vrot.lane.b32.xlu0 %v203, 64
    %v206 = vpop.permute.xlu0 %205
    %v208 = vadd.f32 %v198, %v206
    %v209 = vtanh.pop %v208
    %211 = vrot.lane.b32.xlu0 %v209, 96
    %v212 = vpop.permute.xlu0 %211
    %v214 = vmul.f32 %v192, %v212
    %v215 = vpack.c.bf16 %v214, %v214
    %v216 = vpack.c.bf16 %v139, %v139
    %v221 = vunpack.c.l.b16 %v127
    %v222 = vunpack.c.l.b16 %v128
    %v223 = vunpack.c.l.b16 %v129
    %v224 = vunpack.c.l.b16 %v130
    %v225 = vpack.c.b16 %v222, %v221
    %v226 = vpack.c.b16 %v224, %v223
    %v230 = vsel %vm156, %v216, 0
    %232 = vmatpush.bf16.msra.mxu0 0
    %233 = vmatpush.bf16.msra.mxu0 0
    %234 = vmatpush.bf16.msra.mxu0 0
    %235 = vmatpush.bf16.msra.mxu0 0
    %236 = vmatpush.bf16.msra.mxu0 0
    %237 = vmatpush.bf16.msra.mxu0 0
    %238 = vmatpush.bf16.msra.mxu0 %v226
    %239 = vmatpush.bf16.msra.mxu0 %v225
    %240 = vmatmul.bf16.gmra.mxu0 %v230
    %v241 = vpop.f32.mrf.mxu0
    %v242 = vadd.f32 0.0, %v241
    %v243 = vpop.f32.mrf.mxu0
    %244 = vdwg.mxu0
    %246 = vrot.lane.b32.xlu0 %v215, 64
    %v247 = vpop.permute.xlu0 %246
    %v252 = vunpack.c.l.b16 %v123
    %v253 = vunpack.c.l.b16 %v124
    %v254 = vunpack.c.l.b16 %v125
    %v255 = vunpack.c.l.b16 %v126
    %v256 = vpack.c.b16 %v253, %v252
    %v257 = vpack.c.b16 %v255, %v254
    %v261 = vsel %vm156, %v247, 0
    %263 = vmatpush.bf16.msra.mxu0 0
    %264 = vmatpush.bf16.msra.mxu0 0
    %265 = vmatpush.bf16.msra.mxu0 0
    %266 = vmatpush.bf16.msra.mxu0 0
    %267 = vmatpush.bf16.msra.mxu0 0
    %268 = vmatpush.bf16.msra.mxu0 0
    %269 = vmatpush.bf16.msra.mxu0 %v257
    %270 = vmatpush.bf16.msra.mxu0 %v256
    %271 = vmatmul.bf16.gmra.mxu0 %v261
    %v272 = vpop.f32.mrf.mxu0
    %v273 = vadd.f32 %v242, %v272
    %v274 = vpop.f32.mrf.mxu0
    %275 = vdwg.mxu0
    %v276 = vadd.f32 %v273, %v133
    %v277 = vxor.u32 %v276, 2147483648
    %v278 = vmul.f32 %v277, 1.442695
    %v279 = vpow.pop %v278
    %v280 = vadd.f32 %v279, 1.0
    %v281 = vrcp.pop %v280
    %v282 = vmul.f32 %v280, %v281
    %v283 = vsub.f32 1.0, %v282
    %v284 = vmul.f32 %v281, %v283
    %v285 = vadd.f32 %v281, %v284
    %vm286 = vweird.f32 %v280
    %vm287 = vweird.f32 %v281
    %vm288 = vmor %vm286, %vm287
    %v289 = vsel %vm288, %v281, %v285
    %v290 = vand.u32 2147483647, %v280
    %vm291 = vcmp.eq.f32.partialorder %v290, 8.507059e+37
    %v292 = vand.u32 %v280, 2147483648
    %v293 = vor.u32 1.1754944e-38, %v292
    %v294 = vsel %vm291, %v293, %v289
    %v295 = vmul.f32 1.0, %v294
    %v296 = vtanh.pop %v276
    %298 = vrot.lane.b32.xlu0 %v295, 96
    %v299 = vpop.permute.xlu0 %298
    %v301 = vmul.f32 %v296, %v299
    %303 = vrot.lane.b32.xlu0 %v141, 32
    %v304 = vpop.permute.xlu0 %303
    %v306 = vmul.f32 %v295, %v304
    %308 = vrot.lane.b32.xlu0 %v306, 64
    %v309 = vpop.permute.xlu0 %308
    %v311 = vadd.f32 %v301, %v309
    %v312 = vtanh.pop %v311
    %314 = vrot.lane.b32.xlu0 %v312, 96
    %v315 = vpop.permute.xlu0 %314
    %v317 = vmul.f32 %v295, %v315
    %v319 = vrot.slane %v317, 1
    %v320 = vperm.slane %v317, 0
    %v321 = vperm.slane %v319, 0
    %322 = vrot.lane.b32.xlu0 %v320, 64
    %v323 = vpop.permute.xlu0 %322
    %324 = vrot.lane.b32.xlu0 %v321, 64
    %v325 = vpop.permute.xlu0 %324
    %vm328 = vcmask 253952
    %329 = vst.msk [vmem:[#allocation11] sm:$0x1] %vm328, %v323
    %330 = vst.msk [vmem:[#allocation11 + $0x8] sm:$0x1] %vm328, %v325
    %s331 = scalar_lea.vmem [#allocation2], 2
    %v332 = vld [vmem:[%s331] sm:$0x3]
    %333 = vmatpush.bf16.msra.mxu0 0
    %334 = vmatpush.bf16.msra.mxu0 0
    %335 = vmatpush.bf16.msra.mxu0 0
    %336 = vmatpush.bf16.msra.mxu0 0
    %337 = vmatpush.bf16.msra.mxu0 0
    %338 = vmatpush.bf16.msra.mxu0 0
    %339 = vmatpush.bf16.msra.mxu0 %v153
    %340 = vmatpush.bf16.msra.mxu0 %v152
    %341 = vmatmul.bf16.gmra.mxu0 %v261
    %v342 = vpop.f32.mrf.mxu0
    %v343 = vadd.f32 0.0, %v342
    %v344 = vpop.f32.mrf.mxu0
    %345 = vdwg.mxu0
    %v346 = vadd.f32 %v332, %v343
    %v347 = vxor.u32 %v346, 2147483648
    %v348 = vmul.f32 %v347, 1.442695
    %v349 = vpow.pop %v348
    %v350 = vadd.f32 %v349, 1.0
    %v351 = vrcp.pop %v350
    %v352 = vmul.f32 %v350, %v351
    %v353 = vsub.f32 1.0, %v352
    %v354 = vmul.f32 %v351, %v353
    %v355 = vadd.f32 %v351, %v354
    %vm356 = vweird.f32 %v350
    %vm357 = vweird.f32 %v351
    %vm358 = vmor %vm356, %vm357
    %v359 = vsel %vm358, %v351, %v355
    %v360 = vand.u32 2147483647, %v350
    %vm361 = vcmp.eq.f32.partialorder %v360, 8.507059e+37
    %v362 = vand.u32 %v350, 2147483648
    %v363 = vor.u32 1.1754944e-38, %v362
    %v364 = vsel %vm361, %v363, %v359
    %v365 = vmul.f32 1.0, %v364
    %v366 = vtanh.pop %v346
    %368 = vrot.lane.b32.xlu0 %v365, 96
    %v369 = vpop.permute.xlu0 %368
    %v371 = vmul.f32 %v366, %v369
    %373 = vrot.lane.b32.xlu0 %v208, 64
    %v374 = vpop.permute.xlu0 %373
    %v376 = vmul.f32 %v365, %v374
    %378 = vrot.lane.b32.xlu0 %v376, 64
    %v379 = vpop.permute.xlu0 %378
    %v381 = vadd.f32 %v371, %v379
    %v382 = vtanh.pop %v381
    %384 = vrot.lane.b32.xlu0 %v382, 96
    %v385 = vpop.permute.xlu0 %384
    %v387 = vmul.f32 %v365, %v385
    %v388 = vpack.c.bf16 %v387, %v387
    %v389 = vpack.c.bf16 %v317, %v317
    %391 = vrot.lane.b32.xlu0 %v389, 64
    %v392 = vpop.permute.xlu0 %391
    %v394 = vsel %vm156, %v392, 0
    %396 = vmatpush.bf16.msra.mxu0 0
    %397 = vmatpush.bf16.msra.mxu0 0
    %398 = vmatpush.bf16.msra.mxu0 0
    %399 = vmatpush.bf16.msra.mxu0 0
    %400 = vmatpush.bf16.msra.mxu0 0
    %401 = vmatpush.bf16.msra.mxu0 0
    %402 = vmatpush.bf16.msra.mxu0 %v226
    %403 = vmatpush.bf16.msra.mxu0 %v225
    %404 = vmatmul.bf16.gmra.mxu0 %v394
    %v405 = vpop.f32.mrf.mxu0
    %v406 = vadd.f32 0.0, %v405
    %v407 = vpop.f32.mrf.mxu0
    %408 = vdwg.mxu0
    %410 = vrot.lane.b32.xlu0 %v388, 64
    %v411 = vpop.permute.xlu0 %410
    %v413 = vsel %vm156, %v411, 0
    %415 = vmatpush.bf16.msra.mxu0 0
    %416 = vmatpush.bf16.msra.mxu0 0
    %417 = vmatpush.bf16.msra.mxu0 0
    %418 = vmatpush.bf16.msra.mxu0 0
    %419 = vmatpush.bf16.msra.mxu0 0
    %420 = vmatpush.bf16.msra.mxu0 0
    %421 = vmatpush.bf16.msra.mxu0 %v257
    %422 = vmatpush.bf16.msra.mxu0 %v256
    %423 = vmatmul.bf16.gmra.mxu0 %v413
    %v424 = vpop.f32.mrf.mxu0
    %v425 = vadd.f32 %v406, %v424
    %v426 = vpop.f32.mrf.mxu0
    %427 = vdwg.mxu0
    %v428 = vadd.f32 %v425, %v133
    %v429 = vxor.u32 %v428, 2147483648
    %v430 = vmul.f32 %v429, 1.442695
    %v431 = vpow.pop %v430
    %v432 = vadd.f32 %v431, 1.0
    %v433 = vrcp.pop %v432
    %v434 = vmul.f32 %v432, %v433
    %v435 = vsub.f32 1.0, %v434
    %v436 = vmul.f32 %v433, %v435
    %v437 = vadd.f32 %v433, %v436
    %vm438 = vweird.f32 %v432
    %vm439 = vweird.f32 %v433
    %vm440 = vmor %vm438, %vm439
    %v441 = vsel %vm440, %v433, %v437
    %v442 = vand.u32 2147483647, %v432
    %vm443 = vcmp.eq.f32.partialorder %v442, 8.507059e+37
    %v444 = vand.u32 %v432, 2147483648
    %v445 = vor.u32 1.1754944e-38, %v444
    %v446 = vsel %vm443, %v445, %v441
    %v447 = vmul.f32 1.0, %v446
    %v448 = vtanh.pop %v428
    %450 = vrot.lane.b32.xlu0 %v447, 96
    %v451 = vpop.permute.xlu0 %450
    %v453 = vmul.f32 %v448, %v451
    %455 = vrot.lane.b32.xlu0 %v311, 64
    %v456 = vpop.permute.xlu0 %455
    %v458 = vmul.f32 %v447, %v456
    %460 = vrot.lane.b32.xlu0 %v458, 64
    %v461 = vpop.permute.xlu0 %460
    %v463 = vadd.f32 %v453, %v461
    %v464 = vtanh.pop %v463
    %466 = vrot.lane.b32.xlu0 %v464, 96
    %v467 = vpop.permute.xlu0 %466
    %v469 = vmul.f32 %v447, %v467
    %v471 = vrot.slane %v469, 1
    %v472 = vperm.slane %v469, 0
    %v473 = vperm.slane %v471, 0
    %474 = vrot.lane.b32.xlu0 %v472, 64
    %v475 = vpop.permute.xlu0 %474
    %476 = vrot.lane.b32.xlu0 %v473, 64
    %v477 = vpop.permute.xlu0 %476
    %480 = vst.msk [vmem:[#allocation11 + $0x1] sm:$0x1] %vm328, %v475
    %481 = vst.msk [vmem:[#allocation11 + $0x9] sm:$0x1] %vm328, %v477
    %s482 = scalar_lea.vmem [#allocation2], 4
    %v483 = vld [vmem:[%s482] sm:$0x3]
    %484 = vmatpush.bf16.msra.mxu0 0
    %485 = vmatpush.bf16.msra.mxu0 0
    %486 = vmatpush.bf16.msra.mxu0 0
    %487 = vmatpush.bf16.msra.mxu0 0
    %488 = vmatpush.bf16.msra.mxu0 0
    %489 = vmatpush.bf16.msra.mxu0 0
    %490 = vmatpush.bf16.msra.mxu0 %v153
    %491 = vmatpush.bf16.msra.mxu0 %v152
    %492 = vmatmul.bf16.gmra.mxu0 %v413
    %v493 = vpop.f32.mrf.mxu0
    %v494 = vadd.f32 0.0, %v493
    %v495 = vpop.f32.mrf.mxu0
    %496 = vdwg.mxu0
    %v497 = vadd.f32 %v483, %v494
    %v498 = vxor.u32 %v497, 2147483648
    %v499 = vmul.f32 %v498, 1.442695
    %v500 = vpow.pop %v499
    %v501 = vadd.f32 %v500, 1.0
    %v502 = vrcp.pop %v501
    %v503 = vmul.f32 %v501, %v502
    %v504 = vsub.f32 1.0, %v503
    %v505 = vmul.f32 %v502, %v504
    %v506 = vadd.f32 %v502, %v505
    %vm507 = vweird.f32 %v501
    %vm508 = vweird.f32 %v502
    %vm509 = vmor %vm507, %vm508
    %v510 = vsel %vm509, %v502, %v506
    %v511 = vand.u32 2147483647, %v501
    %vm512 = vcmp.eq.f32.partialorder %v511, 8.507059e+37
    %v513 = vand.u32 %v501, 2147483648
    %v514 = vor.u32 1.1754944e-38, %v513
    %v515 = vsel %vm512, %v514, %v510
    %v516 = vmul.f32 1.0, %v515
    %v517 = vtanh.pop %v497
    %519 = vrot.lane.b32.xlu0 %v516, 96
    %v520 = vpop.permute.xlu0 %519
    %v522 = vmul.f32 %v517, %v520
    %524 = vrot.lane.b32.xlu0 %v381, 64
    %v525 = vpop.permute.xlu0 %524
    %v527 = vmul.f32 %v516, %v525
    %529 = vrot.lane.b32.xlu0 %v527, 64
    %v530 = vpop.permute.xlu0 %529
    %v532 = vadd.f32 %v522, %v530
    %v533 = vtanh.pop %v532
    %535 = vrot.lane.b32.xlu0 %v533, 96
    %v536 = vpop.permute.xlu0 %535
    %v538 = vmul.f32 %v516, %v536
    %v539 = vpack.c.bf16 %v538, %v538
    %v540 = vpack.c.bf16 %v469, %v469
    %542 = vrot.lane.b32.xlu0 %v540, 64
    %v543 = vpop.permute.xlu0 %542
    %v545 = vsel %vm156, %v543, 0
    %547 = vmatpush.bf16.msra.mxu0 0
    %548 = vmatpush.bf16.msra.mxu0 0
    %549 = vmatpush.bf16.msra.mxu0 0
    %550 = vmatpush.bf16.msra.mxu0 0
    %551 = vmatpush.bf16.msra.mxu0 0
    %552 = vmatpush.bf16.msra.mxu0 0
    %553 = vmatpush.bf16.msra.mxu0 %v226
    %554 = vmatpush.bf16.msra.mxu0 %v225
    %555 = vmatmul.bf16.gmra.mxu0 %v545
    %v556 = vpop.f32.mrf.mxu0
    %v557 = vadd.f32 0.0, %v556
    %v558 = vpop.f32.mrf.mxu0
    %559 = vdwg.mxu0
    %561 = vrot.lane.b32.xlu0 %v539, 64
    %v562 = vpop.permute.xlu0 %561
    %v564 = vsel %vm156, %v562, 0
    %566 = vmatpush.bf16.msra.mxu0 0
    %567 = vmatpush.bf16.msra.mxu0 0
    %568 = vmatpush.bf16.msra.mxu0 0
    %569 = vmatpush.bf16.msra.mxu0 0
    %570 = vmatpush.bf16.msra.mxu0 0
    %571 = vmatpush.bf16.msra.mxu0 0
    %572 = vmatpush.bf16.msra.mxu0 %v257
    %573 = vmatpush.bf16.msra.mxu0 %v256
    %574 = vmatmul.bf16.gmra.mxu0 %v564
    %v575 = vpop.f32.mrf.mxu0
    %v576 = vadd.f32 %v557, %v575
    %v577 = vpop.f32.mrf.mxu0
    %578 = vdwg.mxu0
    %v579 = vadd.f32 %v576, %v133
    %v580 = vxor.u32 %v579, 2147483648
    %v581 = vmul.f32 %v580, 1.442695
    %v582 = vpow.pop %v581
    %v583 = vadd.f32 %v582, 1.0
    %v584 = vrcp.pop %v583
    %v585 = vmul.f32 %v583, %v584
    %v586 = vsub.f32 1.0, %v585
    %v587 = vmul.f32 %v584, %v586
    %v588 = vadd.f32 %v584, %v587
    %vm589 = vweird.f32 %v583
    %vm590 = vweird.f32 %v584
    %vm591 = vmor %vm589, %vm590
    %v592 = vsel %vm591, %v584, %v588
    %v593 = vand.u32 2147483647, %v583
    %vm594 = vcmp.eq.f32.partialorder %v593, 8.507059e+37
    %v595 = vand.u32 %v583, 2147483648
    %v596 = vor.u32 1.1754944e-38, %v595
    %v597 = vsel %vm594, %v596, %v592
    %v598 = vmul.f32 1.0, %v597
    %v599 = vtanh.pop %v579
    %601 = vrot.lane.b32.xlu0 %v598, 96
    %v602 = vpop.permute.xlu0 %601
    %v604 = vmul.f32 %v599, %v602
    %606 = vrot.lane.b32.xlu0 %v463, 64
    %v607 = vpop.permute.xlu0 %606
    %v609 = vmul.f32 %v598, %v607
    %611 = vrot.lane.b32.xlu0 %v609, 64
    %v612 = vpop.permute.xlu0 %611
    %v614 = vadd.f32 %v604, %v612
    %v615 = vtanh.pop %v614
    %617 = vrot.lane.b32.xlu0 %v615, 96
    %v618 = vpop.permute.xlu0 %617
    %v620 = vmul.f32 %v598, %v618
    %v622 = vrot.slane %v620, 1
    %v623 = vperm.slane %v620, 0
    %v624 = vperm.slane %v622, 0
    %625 = vrot.lane.b32.xlu0 %v623, 64
    %v626 = vpop.permute.xlu0 %625
    %627 = vrot.lane.b32.xlu0 %v624, 64
    %v628 = vpop.permute.xlu0 %627
    %631 = vst.msk [vmem:[#allocation11 + $0x2] sm:$0x1] %vm328, %v626
    %632 = vst.msk [vmem:[#allocation11 + $0xa] sm:$0x1] %vm328, %v628
    %s633 = scalar_lea.vmem [#allocation2], 6
    %v634 = vld [vmem:[%s633] sm:$0x3]
    %635 = vmatpush.bf16.msra.mxu0 0
    %636 = vmatpush.bf16.msra.mxu0 0
    %637 = vmatpush.bf16.msra.mxu0 0
    %638 = vmatpush.bf16.msra.mxu0 0
    %639 = vmatpush.bf16.msra.mxu0 0
    %640 = vmatpush.bf16.msra.mxu0 0
    %641 = vmatpush.bf16.msra.mxu0 %v153
    %642 = vmatpush.bf16.msra.mxu0 %v152
    %643 = vmatmul.bf16.gmra.mxu0 %v564
    %v644 = vpop.f32.mrf.mxu0
    %v645 = vadd.f32 0.0, %v644
    %v646 = vpop.f32.mrf.mxu0
    %647 = vdwg.mxu0
    %v648 = vadd.f32 %v634, %v645
    %v649 = vxor.u32 %v648, 2147483648
    %v650 = vmul.f32 %v649, 1.442695
    %v651 = vpow.pop %v650
    %v652 = vadd.f32 %v651, 1.0
    %v653 = vrcp.pop %v652
    %v654 = vmul.f32 %v652, %v653
    %v655 = vsub.f32 1.0, %v654
    %v656 = vmul.f32 %v653, %v655
    %v657 = vadd.f32 %v653, %v656
    %vm658 = vweird.f32 %v652
    %vm659 = vweird.f32 %v653
    %vm660 = vmor %vm658, %vm659
    %v661 = vsel %vm660, %v653, %v657
    %v662 = vand.u32 2147483647, %v652
    %vm663 = vcmp.eq.f32.partialorder %v662, 8.507059e+37
    %v664 = vand.u32 %v652, 2147483648
    %v665 = vor.u32 1.1754944e-38, %v664
    %v666 = vsel %vm663, %v665, %v661
    %v667 = vmul.f32 1.0, %v666
    %v668 = vtanh.pop %v648
    %670 = vrot.lane.b32.xlu0 %v667, 96
    %v671 = vpop.permute.xlu0 %670
    %v673 = vmul.f32 %v668, %v671
    %675 = vrot.lane.b32.xlu0 %v532, 64
    %v676 = vpop.permute.xlu0 %675
    %v678 = vmul.f32 %v667, %v676
    %680 = vrot.lane.b32.xlu0 %v678, 64
    %v681 = vpop.permute.xlu0 %680
    %v683 = vadd.f32 %v673, %v681
    %v684 = vtanh.pop %v683
    %686 = vrot.lane.b32.xlu0 %v684, 96
    %v687 = vpop.permute.xlu0 %686
    %v689 = vmul.f32 %v667, %v687
    %v690 = vpack.c.bf16 %v689, %v689
    %v691 = vpack.c.bf16 %v620, %v620
    %693 = vrot.lane.b32.xlu0 %v691, 64
    %v694 = vpop.permute.xlu0 %693
    %v696 = vsel %vm156, %v694, 0
    %698 = vmatpush.bf16.msra.mxu0 0
    %699 = vmatpush.bf16.msra.mxu0 0
    %700 = vmatpush.bf16.msra.mxu0 0
    %701 = vmatpush.bf16.msra.mxu0 0
    %702 = vmatpush.bf16.msra.mxu0 0
    %703 = vmatpush.bf16.msra.mxu0 0
    %704 = vmatpush.bf16.msra.mxu0 %v226
    %705 = vmatpush.bf16.msra.mxu0 %v225
    %706 = vmatmul.bf16.gmra.mxu0 %v696
    %v707 = vpop.f32.mrf.mxu0
    %v708 = vadd.f32 0.0, %v707
    %v709 = vpop.f32.mrf.mxu0
    %710 = vdwg.mxu0
    %712 = vrot.lane.b32.xlu0 %v690, 64
    %v713 = vpop.permute.xlu0 %712
    %v715 = vsel %vm156, %v713, 0
    %717 = vmatpush.bf16.msra.mxu0 0
    %718 = vmatpush.bf16.msra.mxu0 0
    %719 = vmatpush.bf16.msra.mxu0 0
    %720 = vmatpush.bf16.msra.mxu0 0
    %721 = vmatpush.bf16.msra.mxu0 0
    %722 = vmatpush.bf16.msra.mxu0 0
    %723 = vmatpush.bf16.msra.mxu0 %v257
    %724 = vmatpush.bf16.msra.mxu0 %v256
    %725 = vmatmul.bf16.gmra.mxu0 %v715
    %v726 = vpop.f32.mrf.mxu0
    %v727 = vadd.f32 %v708, %v726
    %v728 = vpop.f32.mrf.mxu0
    %729 = vdwg.mxu0
    %v730 = vadd.f32 %v727, %v133
    %v731 = vxor.u32 %v730, 2147483648
    %v732 = vmul.f32 %v731, 1.442695
    %v733 = vpow.pop %v732
    %v734 = vadd.f32 %v733, 1.0
    %v735 = vrcp.pop %v734
    %v736 = vmul.f32 %v734, %v735
    %v737 = vsub.f32 1.0, %v736
    %v738 = vmul.f32 %v735, %v737
    %v739 = vadd.f32 %v735, %v738
    %vm740 = vweird.f32 %v734
    %vm741 = vweird.f32 %v735
    %vm742 = vmor %vm740, %vm741
    %v743 = vsel %vm742, %v735, %v739
    %v744 = vand.u32 2147483647, %v734
    %vm745 = vcmp.eq.f32.partialorder %v744, 8.507059e+37
    %v746 = vand.u32 %v734, 2147483648
    %v747 = vor.u32 1.1754944e-38, %v746
    %v748 = vsel %vm745, %v747, %v743
    %v749 = vmul.f32 1.0, %v748
    %v750 = vtanh.pop %v730
    %752 = vrot.lane.b32.xlu0 %v749, 96
    %v753 = vpop.permute.xlu0 %752
    %v755 = vmul.f32 %v750, %v753
    %757 = vrot.lane.b32.xlu0 %v614, 64
    %v758 = vpop.permute.xlu0 %757
    %v760 = vmul.f32 %v749, %v758
    %762 = vrot.lane.b32.xlu0 %v760, 64
    %v763 = vpop.permute.xlu0 %762
    %v765 = vadd.f32 %v755, %v763
    %v766 = vtanh.pop %v765
    %768 = vrot.lane.b32.xlu0 %v766, 96
    %v769 = vpop.permute.xlu0 %768
    %v771 = vmul.f32 %v749, %v769
    %v773 = vrot.slane %v771, 1
    %v774 = vperm.slane %v771, 0
    %v775 = vperm.slane %v773, 0
    %776 = vrot.lane.b32.xlu0 %v774, 64
    %v777 = vpop.permute.xlu0 %776
    %778 = vrot.lane.b32.xlu0 %v775, 64
    %v779 = vpop.permute.xlu0 %778
    %782 = vst.msk [vmem:[#allocation11 + $0x3] sm:$0x1] %vm328, %v777
    %783 = vst.msk [vmem:[#allocation11 + $0xb] sm:$0x1] %vm328, %v779
    %s784 = scalar_lea.vmem [#allocation2], 8
    %v785 = vld [vmem:[%s784] sm:$0x3]
    %786 = vmatpush.bf16.msra.mxu0 0
    %787 = vmatpush.bf16.msra.mxu0 0
    %788 = vmatpush.bf16.msra.mxu0 0
    %789 = vmatpush.bf16.msra.mxu0 0
    %790 = vmatpush.bf16.msra.mxu0 0
    %791 = vmatpush.bf16.msra.mxu0 0
    %792 = vmatpush.bf16.msra.mxu0 %v153
    %793 = vmatpush.bf16.msra.mxu0 %v152
    %794 = vmatmul.bf16.gmra.mxu0 %v715
    %v795 = vpop.f32.mrf.mxu0
    %v796 = vadd.f32 0.0, %v795
    %v797 = vpop.f32.mrf.mxu0
    %798 = vdwg.mxu0
    %v799 = vadd.f32 %v785, %v796
    %v800 = vxor.u32 %v799, 2147483648
    %v801 = vmul.f32 %v800, 1.442695
    %v802 = vpow.pop %v801
    %v803 = vadd.f32 %v802, 1.0
    %v804 = vrcp.pop %v803
    %v805 = vmul.f32 %v803, %v804
    %v806 = vsub.f32 1.0, %v805
    %v807 = vmul.f32 %v804, %v806
    %v808 = vadd.f32 %v804, %v807
    %vm809 = vweird.f32 %v803
    %vm810 = vweird.f32 %v804
    %vm811 = vmor %vm809, %vm810
    %v812 = vsel %vm811, %v804, %v808
    %v813 = vand.u32 2147483647, %v803
    %vm814 = vcmp.eq.f32.partialorder %v813, 8.507059e+37
    %v815 = vand.u32 %v803, 2147483648
    %v816 = vor.u32 1.1754944e-38, %v815
    %v817 = vsel %vm814, %v816, %v812
    %v818 = vmul.f32 1.0, %v817
    %v819 = vtanh.pop %v799
    %821 = vrot.lane.b32.xlu0 %v818, 96
    %v822 = vpop.permute.xlu0 %821
    %v824 = vmul.f32 %v819, %v822
    %826 = vrot.lane.b32.xlu0 %v683, 64
    %v827 = vpop.permute.xlu0 %826
    %v829 = vmul.f32 %v818, %v827
    %831 = vrot.lane.b32.xlu0 %v829, 64
    %v832 = vpop.permute.xlu0 %831
    %v834 = vadd.f32 %v824, %v832
    %v835 = vtanh.pop %v834
    %837 = vrot.lane.b32.xlu0 %v835, 96
    %v838 = vpop.permute.xlu0 %837
    %v840 = vmul.f32 %v818, %v838
    %v841 = vpack.c.bf16 %v840, %v840
    %v842 = vpack.c.bf16 %v771, %v771
    %844 = vrot.lane.b32.xlu0 %v842, 64
    %v845 = vpop.permute.xlu0 %844
    %v847 = vsel %vm156, %v845, 0
    %849 = vmatpush.bf16.msra.mxu0 0
    %850 = vmatpush.bf16.msra.mxu0 0
    %851 = vmatpush.bf16.msra.mxu0 0
    %852 = vmatpush.bf16.msra.mxu0 0
    %853 = vmatpush.bf16.msra.mxu0 0
    %854 = vmatpush.bf16.msra.mxu0 0
    %855 = vmatpush.bf16.msra.mxu0 %v226
    %856 = vmatpush.bf16.msra.mxu0 %v225
    %857 = vmatmul.bf16.gmra.mxu0 %v847
    %v858 = vpop.f32.mrf.mxu0
    %v859 = vadd.f32 0.0, %v858
    %v860 = vpop.f32.mrf.mxu0
    %861 = vdwg.mxu0
    %863 = vrot.lane.b32.xlu0 %v841, 64
    %v864 = vpop.permute.xlu0 %863
    %v866 = vsel %vm156, %v864, 0
    %868 = vmatpush.bf16.msra.mxu0 0
    %869 = vmatpush.bf16.msra.mxu0 0
    %870 = vmatpush.bf16.msra.mxu0 0
    %871 = vmatpush.bf16.msra.mxu0 0
    %872 = vmatpush.bf16.msra.mxu0 0
    %873 = vmatpush.bf16.msra.mxu0 0
    %874 = vmatpush.bf16.msra.mxu0 %v257
    %875 = vmatpush.bf16.msra.mxu0 %v256
    %876 = vmatmul.bf16.gmra.mxu0 %v866
    %v877 = vpop.f32.mrf.mxu0
    %v878 = vadd.f32 %v859, %v877
    %v879 = vpop.f32.mrf.mxu0
    %880 = vdwg.mxu0
    %v881 = vadd.f32 %v878, %v133
    %v882 = vxor.u32 %v881, 2147483648
    %v883 = vmul.f32 %v882, 1.442695
    %v884 = vpow.pop %v883
    %v885 = vadd.f32 %v884, 1.0
    %v886 = vrcp.pop %v885
    %v887 = vmul.f32 %v885, %v886
    %v888 = vsub.f32 1.0, %v887
    %v889 = vmul.f32 %v886, %v888
    %v890 = vadd.f32 %v886, %v889
    %vm891 = vweird.f32 %v885
    %vm892 = vweird.f32 %v886
    %vm893 = vmor %vm891, %vm892
    %v894 = vsel %vm893, %v886, %v890
    %v895 = vand.u32 2147483647, %v885
    %vm896 = vcmp.eq.f32.partialorder %v895, 8.507059e+37
    %v897 = vand.u32 %v885, 2147483648
    %v898 = vor.u32 1.1754944e-38, %v897
    %v899 = vsel %vm896, %v898, %v894
    %v900 = vmul.f32 1.0, %v899
    %v901 = vtanh.pop %v881
    %903 = vrot.lane.b32.xlu0 %v900, 96
    %v904 = vpop.permute.xlu0 %903
    %v906 = vmul.f32 %v901, %v904
    %908 = vrot.lane.b32.xlu0 %v765, 64
    %v909 = vpop.permute.xlu0 %908
    %v911 = vmul.f32 %v900, %v909
    %913 = vrot.lane.b32.xlu0 %v911, 64
    %v914 = vpop.permute.xlu0 %913
    %v916 = vadd.f32 %v906, %v914
    %v917 = vtanh.pop %v916
    %919 = vrot.lane.b32.xlu0 %v917, 96
    %v920 = vpop.permute.xlu0 %919
    %v922 = vmul.f32 %v900, %v920
    %v924 = vrot.slane %v922, 1
    %v925 = vperm.slane %v922, 0
    %v926 = vperm.slane %v924, 0
    %927 = vrot.lane.b32.xlu0 %v925, 64
    %v928 = vpop.permute.xlu0 %927
    %929 = vrot.lane.b32.xlu0 %v926, 64
    %v930 = vpop.permute.xlu0 %929
    %933 = vst.msk [vmem:[#allocation11 + $0x4] sm:$0x1] %vm328, %v928
    %934 = vst.msk [vmem:[#allocation11 + $0xc] sm:$0x1] %vm328, %v930
    %s935 = scalar_lea.vmem [#allocation2], 10
    %v936 = vld [vmem:[%s935] sm:$0x3]
    %937 = vmatpush.bf16.msra.mxu0 0
    %938 = vmatpush.bf16.msra.mxu0 0
    %939 = vmatpush.bf16.msra.mxu0 0
    %940 = vmatpush.bf16.msra.mxu0 0
    %941 = vmatpush.bf16.msra.mxu0 0
    %942 = vmatpush.bf16.msra.mxu0 0
    %943 = vmatpush.bf16.msra.mxu0 %v153
    %944 = vmatpush.bf16.msra.mxu0 %v152
    %945 = vmatmul.bf16.gmra.mxu0 %v866
    %v946 = vpop.f32.mrf.mxu0
    %v947 = vadd.f32 0.0, %v946
    %v948 = vpop.f32.mrf.mxu0
    %949 = vdwg.mxu0
    %v950 = vadd.f32 %v936, %v947
    %v951 = vxor.u32 %v950, 2147483648
    %v952 = vmul.f32 %v951, 1.442695
    %v953 = vpow.pop %v952
    %v954 = vadd.f32 %v953, 1.0
    %v955 = vrcp.pop %v954
    %v956 = vmul.f32 %v954, %v955
    %v957 = vsub.f32 1.0, %v956
    %v958 = vmul.f32 %v955, %v957
    %v959 = vadd.f32 %v955, %v958
    %vm960 = vweird.f32 %v954
    %vm961 = vweird.f32 %v955
    %vm962 = vmor %vm960, %vm961
    %v963 = vsel %vm962, %v955, %v959
    %v964 = vand.u32 2147483647, %v954
    %vm965 = vcmp.eq.f32.partialorder %v964, 8.507059e+37
    %v966 = vand.u32 %v954, 2147483648
    %v967 = vor.u32 1.1754944e-38, %v966
    %v968 = vsel %vm965, %v967, %v963
    %v969 = vmul.f32 1.0, %v968
    %v970 = vtanh.pop %v950
    %972 = vrot.lane.b32.xlu0 %v969, 96
    %v973 = vpop.permute.xlu0 %972
    %v975 = vmul.f32 %v970, %v973
    %977 = vrot.lane.b32.xlu0 %v834, 64
    %v978 = vpop.permute.xlu0 %977
    %v980 = vmul.f32 %v969, %v978
    %982 = vrot.lane.b32.xlu0 %v980, 64
    %v983 = vpop.permute.xlu0 %982
    %v985 = vadd.f32 %v975, %v983
    %v986 = vtanh.pop %v985
    %988 = vrot.lane.b32.xlu0 %v986, 96
    %v989 = vpop.permute.xlu0 %988
    %v991 = vmul.f32 %v969, %v989
    %v992 = vpack.c.bf16 %v991, %v991
    %v993 = vpack.c.bf16 %v922, %v922
    %995 = vrot.lane.b32.xlu0 %v993, 64
    %v996 = vpop.permute.xlu0 %995
    %v998 = vsel %vm156, %v996, 0
    %1000 = vmatpush.bf16.msra.mxu0 0
    %1001 = vmatpush.bf16.msra.mxu0 0
    %1002 = vmatpush.bf16.msra.mxu0 0
    %1003 = vmatpush.bf16.msra.mxu0 0
    %1004 = vmatpush.bf16.msra.mxu0 0
    %1005 = vmatpush.bf16.msra.mxu0 0
    %1006 = vmatpush.bf16.msra.mxu0 %v226
    %1007 = vmatpush.bf16.msra.mxu0 %v225
    %1008 = vmatmul.bf16.gmra.mxu0 %v998
    %v1009 = vpop.f32.mrf.mxu0
    %v1010 = vadd.f32 0.0, %v1009
    %v1011 = vpop.f32.mrf.mxu0
    %1012 = vdwg.mxu0
    %1014 = vrot.lane.b32.xlu0 %v992, 64
    %v1015 = vpop.permute.xlu0 %1014
    %v1017 = vsel %vm156, %v1015, 0
    %1019 = vmatpush.bf16.msra.mxu0 0
    %1020 = vmatpush.bf16.msra.mxu0 0
    %1021 = vmatpush.bf16.msra.mxu0 0
    %1022 = vmatpush.bf16.msra.mxu0 0
    %1023 = vmatpush.bf16.msra.mxu0 0
    %1024 = vmatpush.bf16.msra.mxu0 0
    %1025 = vmatpush.bf16.msra.mxu0 %v257
    %1026 = vmatpush.bf16.msra.mxu0 %v256
    %1027 = vmatmul.bf16.gmra.mxu0 %v1017
    %v1028 = vpop.f32.mrf.mxu0
    %v1029 = vadd.f32 %v1010, %v1028
    %v1030 = vpop.f32.mrf.mxu0
    %1031 = vdwg.mxu0
    %v1032 = vadd.f32 %v1029, %v133
    %v1033 = vxor.u32 %v1032, 2147483648
    %v1034 = vmul.f32 %v1033, 1.442695
    %v1035 = vpow.pop %v1034
    %v1036 = vadd.f32 %v1035, 1.0
    %v1037 = vrcp.pop %v1036
    %v1038 = vmul.f32 %v1036, %v1037
    %v1039 = vsub.f32 1.0, %v1038
    %v1040 = vmul.f32 %v1037, %v1039
    %v1041 = vadd.f32 %v1037, %v1040
    %vm1042 = vweird.f32 %v1036
    %vm1043 = vweird.f32 %v1037
    %vm1044 = vmor %vm1042, %vm1043
    %v1045 = vsel %vm1044, %v1037, %v1041
    %v1046 = vand.u32 2147483647, %v1036
    %vm1047 = vcmp.eq.f32.partialorder %v1046, 8.507059e+37
    %v1048 = vand.u32 %v1036, 2147483648
    %v1049 = vor.u32 1.1754944e-38, %v1048
    %v1050 = vsel %vm1047, %v1049, %v1045
    %v1051 = vmul.f32 1.0, %v1050
    %v1052 = vtanh.pop %v1032
    %1054 = vrot.lane.b32.xlu0 %v1051, 96
    %v1055 = vpop.permute.xlu0 %1054
    %v1057 = vmul.f32 %v1052, %v1055
    %1059 = vrot.lane.b32.xlu0 %v916, 64
    %v1060 = vpop.permute.xlu0 %1059
    %v1062 = vmul.f32 %v1051, %v1060
    %1064 = vrot.lane.b32.xlu0 %v1062, 64
    %v1065 = vpop.permute.xlu0 %1064
    %v1067 = vadd.f32 %v1057, %v1065
    %v1068 = vtanh.pop %v1067
    %1070 = vrot.lane.b32.xlu0 %v1068, 96
    %v1071 = vpop.permute.xlu0 %1070
    %v1073 = vmul.f32 %v1051, %v1071
    %v1075 = vrot.slane %v1073, 1
    %v1076 = vperm.slane %v1073, 0
    %v1077 = vperm.slane %v1075, 0
    %1078 = vrot.lane.b32.xlu0 %v1076, 64
    %v1079 = vpop.permute.xlu0 %1078
    %1080 = vrot.lane.b32.xlu0 %v1077, 64
    %v1081 = vpop.permute.xlu0 %1080
    %1084 = vst.msk [vmem:[#allocation11 + $0x5] sm:$0x1] %vm328, %v1079
    %1085 = vst.msk [vmem:[#allocation11 + $0xd] sm:$0x1] %vm328, %v1081
    %s1086 = scalar_lea.vmem [#allocation2], 12
    %v1087 = vld [vmem:[%s1086] sm:$0x3]
    %1088 = vmatpush.bf16.msra.mxu0 0
    %1089 = vmatpush.bf16.msra.mxu0 0
    %1090 = vmatpush.bf16.msra.mxu0 0
    %1091 = vmatpush.bf16.msra.mxu0 0
    %1092 = vmatpush.bf16.msra.mxu0 0
    %1093 = vmatpush.bf16.msra.mxu0 0
    %1094 = vmatpush.bf16.msra.mxu0 %v153
    %1095 = vmatpush.bf16.msra.mxu0 %v152
    %1096 = vmatmul.bf16.gmra.mxu0 %v1017
    %v1097 = vpop.f32.mrf.mxu0
    %v1098 = vadd.f32 0.0, %v1097
    %v1099 = vpop.f32.mrf.mxu0
    %1100 = vdwg.mxu0
    %v1101 = vadd.f32 %v1087, %v1098
    %v1102 = vxor.u32 %v1101, 2147483648
    %v1103 = vmul.f32 %v1102, 1.442695
    %v1104 = vpow.pop %v1103
    %v1105 = vadd.f32 %v1104, 1.0
    %v1106 = vrcp.pop %v1105
    %v1107 = vmul.f32 %v1105, %v1106
    %v1108 = vsub.f32 1.0, %v1107
    %v1109 = vmul.f32 %v1106, %v1108
    %v1110 = vadd.f32 %v1106, %v1109
    %vm1111 = vweird.f32 %v1105
    %vm1112 = vweird.f32 %v1106
    %vm1113 = vmor %vm1111, %vm1112
    %v1114 = vsel %vm1113, %v1106, %v1110
    %v1115 = vand.u32 2147483647, %v1105
    %vm1116 = vcmp.eq.f32.partialorder %v1115, 8.507059e+37
    %v1117 = vand.u32 %v1105, 2147483648
    %v1118 = vor.u32 1.1754944e-38, %v1117
    %v1119 = vsel %vm1116, %v1118, %v1114
    %v1120 = vmul.f32 1.0, %v1119
    %v1121 = vtanh.pop %v1101
    %1123 = vrot.lane.b32.xlu0 %v1120, 96
    %v1124 = vpop.permute.xlu0 %1123
    %v1126 = vmul.f32 %v1121, %v1124
    %1128 = vrot.lane.b32.xlu0 %v985, 64
    %v1129 = vpop.permute.xlu0 %1128
    %v1131 = vmul.f32 %v1120, %v1129
    %1133 = vrot.lane.b32.xlu0 %v1131, 64
    %v1134 = vpop.permute.xlu0 %1133
    %v1136 = vadd.f32 %v1126, %v1134
    %v1137 = vtanh.pop %v1136
    %1139 = vrot.lane.b32.xlu0 %v1137, 96
    %v1140 = vpop.permute.xlu0 %1139
    %v1142 = vmul.f32 %v1120, %v1140
    %v1143 = vpack.c.bf16 %v1142, %v1142
    %v1144 = vpack.c.bf16 %v1073, %v1073
    %1146 = vrot.lane.b32.xlu0 %v1144, 64
    %v1147 = vpop.permute.xlu0 %1146
    %v1149 = vsel %vm156, %v1147, 0
    %1151 = vmatpush.bf16.msra.mxu0 0
    %1152 = vmatpush.bf16.msra.mxu0 0
    %1153 = vmatpush.bf16.msra.mxu0 0
    %1154 = vmatpush.bf16.msra.mxu0 0
    %1155 = vmatpush.bf16.msra.mxu0 0
    %1156 = vmatpush.bf16.msra.mxu0 0
    %1157 = vmatpush.bf16.msra.mxu0 %v226
    %1158 = vmatpush.bf16.msra.mxu0 %v225
    %1159 = vmatmul.bf16.gmra.mxu0 %v1149
    %v1160 = vpop.f32.mrf.mxu0
    %v1161 = vadd.f32 0.0, %v1160
    %v1162 = vpop.f32.mrf.mxu0
    %1163 = vdwg.mxu0
    %1165 = vrot.lane.b32.xlu0 %v1143, 64
    %v1166 = vpop.permute.xlu0 %1165
    %v1168 = vsel %vm156, %v1166, 0
    %1170 = vmatpush.bf16.msra.mxu0 0
    %1171 = vmatpush.bf16.msra.mxu0 0
    %1172 = vmatpush.bf16.msra.mxu0 0
    %1173 = vmatpush.bf16.msra.mxu0 0
    %1174 = vmatpush.bf16.msra.mxu0 0
    %1175 = vmatpush.bf16.msra.mxu0 0
    %1176 = vmatpush.bf16.msra.mxu0 %v257
    %1177 = vmatpush.bf16.msra.mxu0 %v256
    %1178 = vmatmul.bf16.gmra.mxu0 %v1168
    %v1179 = vpop.f32.mrf.mxu0
    %v1180 = vadd.f32 %v1161, %v1179
    %v1181 = vpop.f32.mrf.mxu0
    %1182 = vdwg.mxu0
    %v1183 = vadd.f32 %v1180, %v133
    %v1184 = vxor.u32 %v1183, 2147483648
    %v1185 = vmul.f32 %v1184, 1.442695
    %v1186 = vpow.pop %v1185
    %v1187 = vadd.f32 %v1186, 1.0
    %v1188 = vrcp.pop %v1187
    %v1189 = vmul.f32 %v1187, %v1188
    %v1190 = vsub.f32 1.0, %v1189
    %v1191 = vmul.f32 %v1188, %v1190
    %v1192 = vadd.f32 %v1188, %v1191
    %vm1193 = vweird.f32 %v1187
    %vm1194 = vweird.f32 %v1188
    %vm1195 = vmor %vm1193, %vm1194
    %v1196 = vsel %vm1195, %v1188, %v1192
    %v1197 = vand.u32 2147483647, %v1187
    %vm1198 = vcmp.eq.f32.partialorder %v1197, 8.507059e+37
    %v1199 = vand.u32 %v1187, 2147483648
    %v1200 = vor.u32 1.1754944e-38, %v1199
    %v1201 = vsel %vm1198, %v1200, %v1196
    %v1202 = vmul.f32 1.0, %v1201
    %v1203 = vtanh.pop %v1183
    %1205 = vrot.lane.b32.xlu0 %v1202, 96
    %v1206 = vpop.permute.xlu0 %1205
    %v1208 = vmul.f32 %v1203, %v1206
    %1210 = vrot.lane.b32.xlu0 %v1067, 64
    %v1211 = vpop.permute.xlu0 %1210
    %v1213 = vmul.f32 %v1202, %v1211
    %1215 = vrot.lane.b32.xlu0 %v1213, 64
    %v1216 = vpop.permute.xlu0 %1215
    %v1218 = vadd.f32 %v1208, %v1216
    %v1219 = vtanh.pop %v1218
    %1221 = vrot.lane.b32.xlu0 %v1219, 96
    %v1222 = vpop.permute.xlu0 %1221
    %v1224 = vmul.f32 %v1202, %v1222
    %v1226 = vrot.slane %v1224, 1
    %v1227 = vperm.slane %v1224, 0
    %v1228 = vperm.slane %v1226, 0
    %1229 = vrot.lane.b32.xlu0 %v1227, 64
    %v1230 = vpop.permute.xlu0 %1229
    %1231 = vrot.lane.b32.xlu0 %v1228, 64
    %v1232 = vpop.permute.xlu0 %1231
    %1235 = vst.msk [vmem:[#allocation11 + $0x6] sm:$0x1] %vm328, %v1230
    %1236 = vst.msk [vmem:[#allocation11 + $0xe] sm:$0x1] %vm328, %v1232
    %s1237 = scalar_lea.vmem [#allocation2], 14
    %v1238 = vld [vmem:[%s1237] sm:$0x3]
    %1239 = vmatpush.bf16.msra.mxu0 0
    %1240 = vmatpush.bf16.msra.mxu0 0
    %1241 = vmatpush.bf16.msra.mxu0 0
    %1242 = vmatpush.bf16.msra.mxu0 0
    %1243 = vmatpush.bf16.msra.mxu0 0
    %1244 = vmatpush.bf16.msra.mxu0 0
    %1245 = vmatpush.bf16.msra.mxu0 %v153
    %1246 = vmatpush.bf16.msra.mxu0 %v152
    %1247 = vmatmul.bf16.gmra.mxu0 %v1168
    %v1248 = vpop.f32.mrf.mxu0
    %v1249 = vadd.f32 0.0, %v1248
    %v1250 = vpop.f32.mrf.mxu0
    %1251 = vdwg.mxu0
    %v1252 = vadd.f32 %v1238, %v1249
    %v1253 = vxor.u32 %v1252, 2147483648
    %v1254 = vmul.f32 %v1253, 1.442695
    %v1255 = vpow.pop %v1254
    %v1256 = vadd.f32 %v1255, 1.0
    %v1257 = vrcp.pop %v1256
    %v1258 = vmul.f32 %v1256, %v1257
    %v1259 = vsub.f32 1.0, %v1258
    %v1260 = vmul.f32 %v1257, %v1259
    %v1261 = vadd.f32 %v1257, %v1260
    %vm1262 = vweird.f32 %v1256
    %vm1263 = vweird.f32 %v1257
    %vm1264 = vmor %vm1262, %vm1263
    %v1265 = vsel %vm1264, %v1257, %v1261
    %v1266 = vand.u32 2147483647, %v1256
    %vm1267 = vcmp.eq.f32.partialorder %v1266, 8.507059e+37
    %v1268 = vand.u32 %v1256, 2147483648
    %v1269 = vor.u32 1.1754944e-38, %v1268
    %v1270 = vsel %vm1267, %v1269, %v1265
    %v1271 = vmul.f32 1.0, %v1270
    %v1272 = vtanh.pop %v1252
    %1274 = vrot.lane.b32.xlu0 %v1271, 96
    %v1275 = vpop.permute.xlu0 %1274
    %v1277 = vmul.f32 %v1272, %v1275
    %1279 = vrot.lane.b32.xlu0 %v1136, 64
    %v1280 = vpop.permute.xlu0 %1279
    %v1282 = vmul.f32 %v1271, %v1280
    %1284 = vrot.lane.b32.xlu0 %v1282, 64
    %v1285 = vpop.permute.xlu0 %1284
    %v1287 = vadd.f32 %v1277, %v1285
    %v1288 = vtanh.pop %v1287
    %1290 = vrot.lane.b32.xlu0 %v1288, 96
    %v1291 = vpop.permute.xlu0 %1290
    %v1293 = vmul.f32 %v1271, %v1291
    %v1294 = vpack.c.bf16 %v1293, %v1293
    %v1295 = vpack.c.bf16 %v1224, %v1224
    %1297 = vrot.lane.b32.xlu0 %v1295, 64
    %v1298 = vpop.permute.xlu0 %1297
    %v1300 = vsel %vm156, %v1298, 0
    %1302 = vmatpush.bf16.msra.mxu0 0
    %1303 = vmatpush.bf16.msra.mxu0 0
    %1304 = vmatpush.bf16.msra.mxu0 0
    %1305 = vmatpush.bf16.msra.mxu0 0
    %1306 = vmatpush.bf16.msra.mxu0 0
    %1307 = vmatpush.bf16.msra.mxu0 0
    %1308 = vmatpush.bf16.msra.mxu0 %v226
    %1309 = vmatpush.bf16.msra.mxu0 %v225
    %1310 = vmatmul.bf16.gmra.mxu0 %v1300
    %v1311 = vpop.f32.mrf.mxu0
    %v1312 = vadd.f32 0.0, %v1311
    %v1313 = vpop.f32.mrf.mxu0
    %1314 = vdwg.mxu0
    %1316 = vrot.lane.b32.xlu0 %v1294, 64
    %v1317 = vpop.permute.xlu0 %1316
    %v1319 = vsel %vm156, %v1317, 0
    %1321 = vmatpush.bf16.msra.mxu0 0
    %1322 = vmatpush.bf16.msra.mxu0 0
    %1323 = vmatpush.bf16.msra.mxu0 0
    %1324 = vmatpush.bf16.msra.mxu0 0
    %1325 = vmatpush.bf16.msra.mxu0 0
    %1326 = vmatpush.bf16.msra.mxu0 0
    %1327 = vmatpush.bf16.msra.mxu0 %v257
    %1328 = vmatpush.bf16.msra.mxu0 %v256
    %1329 = vmatmul.bf16.gmra.mxu0 %v1319
    %v1330 = vpop.f32.mrf.mxu0
    %v1331 = vadd.f32 %v1312, %v1330
    %v1332 = vpop.f32.mrf.mxu0
    %1333 = vdwg.mxu0
    %v1334 = vadd.f32 %v1331, %v133
    %v1335 = vxor.u32 %v1334, 2147483648
    %v1336 = vmul.f32 %v1335, 1.442695
    %v1337 = vpow.pop %v1336
    %v1338 = vadd.f32 %v1337, 1.0
    %v1339 = vrcp.pop %v1338
    %v1340 = vmul.f32 %v1338, %v1339
    %v1341 = vsub.f32 1.0, %v1340
    %v1342 = vmul.f32 %v1339, %v1341
    %v1343 = vadd.f32 %v1339, %v1342
    %vm1344 = vweird.f32 %v1338
    %vm1345 = vweird.f32 %v1339
    %vm1346 = vmor %vm1344, %vm1345
    %v1347 = vsel %vm1346, %v1339, %v1343
    %v1348 = vand.u32 2147483647, %v1338
    %vm1349 = vcmp.eq.f32.partialorder %v1348, 8.507059e+37
    %v1350 = vand.u32 %v1338, 2147483648
    %v1351 = vor.u32 1.1754944e-38, %v1350
    %v1352 = vsel %vm1349, %v1351, %v1347
    %v1353 = vmul.f32 1.0, %v1352
    %v1354 = vtanh.pop %v1334
    %1356 = vrot.lane.b32.xlu0 %v1353, 96
    %v1357 = vpop.permute.xlu0 %1356
    %v1359 = vmul.f32 %v1354, %v1357
    %1361 = vrot.lane.b32.xlu0 %v1218, 64
    %v1362 = vpop.permute.xlu0 %1361
    %v1364 = vmul.f32 %v1353, %v1362
    %1366 = vrot.lane.b32.xlu0 %v1364, 64
    %v1367 = vpop.permute.xlu0 %1366
    %v1369 = vadd.f32 %v1359, %v1367
    %v1370 = vtanh.pop %v1369
    %1372 = vrot.lane.b32.xlu0 %v1370, 96
    %v1373 = vpop.permute.xlu0 %1372
    %v1375 = vmul.f32 %v1353, %v1373
    %v1377 = vrot.slane %v1375, 1
    %v1378 = vperm.slane %v1375, 0
    %v1379 = vperm.slane %v1377, 0
    %1380 = vrot.lane.b32.xlu0 %v1378, 64
    %v1381 = vpop.permute.xlu0 %1380
    %1382 = vrot.lane.b32.xlu0 %v1379, 64
    %v1383 = vpop.permute.xlu0 %1382
    %1386 = vst.msk [vmem:[#allocation11 + $0x7] sm:$0x1] %vm328, %v1381
    %1387 = vst.msk [vmem:[#allocation11 + $0xf] sm:$0x1] %vm328, %v1383
    %1389 = vrot.lane.b32.xlu0 %v1293, 64
    %v1390 = vpop.permute.xlu0 %1389
    %vm1392 = vcmask 254976
    %1393 = vst.msk [vmem:[#allocation12] sm:$0x3] %vm1392, %v1390
    %1395 = vrot.lane.b32.xlu0 %v1287, 32
    %v1396 = vpop.permute.xlu0 %1395
    %1398 = vst.msk [vmem:[%s136] sm:$0x3] %vm1392, %v1396
    %1399 = vrot.lane.b32.xlu0 %v1375, 64
    %v1400 = vpop.permute.xlu0 %1399
    %1402 = vst.msk [vmem:[%s138] sm:$0x3] %vm1392, %v1400
    %1404 = vrot.lane.b32.xlu0 %v1369, 32
    %v1405 = vpop.permute.xlu0 %1404
    %1407 = vst.msk [vmem:[%s140] sm:$0x3] %vm1392, %v1405
    // Predicated region
    $region50: #{tpu_custom_call.1} parent=1 // pred_check
      _
    $region51: #{tpu_custom_call.1} parent=1 // pred_check_branch
      %1409 = sbr.rel (0) target = $region53
    $region52: #{tpu_custom_call.1} parent=1 // pred_region
      %1411 = vsyncadd [#allocation4], 0
      %s1412 = sshll.u32 [#allocation11], 4
      %s1413 = int_to_ptr.vmem [resolvable:$true] %s1412
      %s1414 = sshll.u32 %s6, 4
      %s1415 = int_to_ptr.hbm [resolvable:$true] %s1414
      %1420 = dma.vmem_to_hbm [thread:$0]  %s1413, 256, %s1415, [#allocation4], 128, 128, 8
    $region53: #{tpu_custom_call.1} parent=1 // pred_fallthru
      _
    // Predicated region
    $region54: #{tpu_custom_call.1} parent=1 // pred_check
      _
    $region55: #{tpu_custom_call.1} parent=1 // pred_check_branch
      %1422 = sbr.rel (0) target = $region57
    $region56: #{tpu_custom_call.1} parent=1 // pred_region
      %1424 = vsyncadd [#allocation13], 0
      %s1425 = sshll.u32 [#allocation12], 4
      %s1426 = int_to_ptr.vmem [resolvable:$true] %s1425
      %s1427 = sshll.u32 %s7, 4
      %s1428 = int_to_ptr.hbm [resolvable:$true] %s1427
      %1433 = dma.vmem_to_hbm [thread:$0]  %s1426, 128, %s1428, [#allocation13], 32, 32, 2
    $region57: #{tpu_custom_call.1} parent=1 // pred_fallthru
      _
    // Predicated region
    $region58: #{tpu_custom_call.1} parent=1 // pred_check
      _
    $region59: #{tpu_custom_call.1} parent=1 // pred_check_branch
      %1435 = sbr.rel (0) target = $region61
    $region60: #{tpu_custom_call.1} parent=1 // pred_region
      %1437 = dma.done [#allocation4], 256
    $region61: #{tpu_custom_call.1} parent=1 // pred_fallthru
      _
    // Predicated region
    $region62: #{tpu_custom_call.1} parent=1 // pred_check
      _
    $region63: #{tpu_custom_call.1} parent=1 // pred_check_branch
      %1439 = sbr.rel (0) target = $region65
    $region64: #{tpu_custom_call.1} parent=1 // pred_region
      %1441 = dma.done [#allocation13], 128
    $region65: #{tpu_custom_call.1} parent=1 // pred_fallthru
      _
    %1442 = vsyncpa [#allocation3], 1
    %1443 = vsyncpa [#allocation6], 1
    %1444 = vsyncpa [#allocation9], 1
    %1445 = vsyncpa [#allocation4], 1
    %1446 = vsyncpa [#allocation13], 1

</llo_original>
